<compile_context>
chip_gen: v5e
topology: v5e:2x2
jax: 0.10.0
libtpu: 0.0.40
codegen_flags: <defaults>
</compile_context>

<pallas_src>
import functools

import jax
import jax.numpy as jnp
from jax import lax
from jax.experimental import pallas as pl
from jax.experimental.pallas import tpu as pltpu

C = 3        # in/out channels (fixed by the module)
K = 3        # kernel size
TILE_N = 8   # batch tile: one full sublane group


def _res_block_kernel(x_ref, w_ref, b_ref, o_ref, pad_ref, *, width):
    # x_ref  : (C, TILE_N, HWP)           input tile, channel-major, spatial flattened (VMEM)
    # w_ref  : (C*C*K*K,)                 conv2 weights, flattened OIHW (SMEM)
    # b_ref  : (C,)                       conv2 bias (SMEM)
    # o_ref  : (C, TILE_N, HWP)           output tile (VMEM)
    # pad_ref: (C, TILE_N, HWP + 2*PAD)   zero-margin halo scratch, PAD is 128-aligned (VMEM)
    c, tn, hwp = x_ref.shape
    pad = (pad_ref.shape[2] - hwp) // 2

    # Zero only the halo margins; the interior is fully overwritten just below.  PAD >= width+1,
    # so every tap that falls off the top/bottom of the image reads zeros.  Both margin stores
    # and the interior copy are 128-lane-aligned (unmasked vst).
    margin = jnp.zeros((c, tn, pad), jnp.float32)
    pad_ref[:, :, :pad] = margin
    pad_ref[:, :, pad + hwp:] = margin
    pad_ref[:, :, pad:pad + hwp] = x_ref[...].astype(jnp.float32)

    # Per-lane masks killing the horizontal wrap of a flattened +/-1 column shift.
    col = lax.broadcasted_iota(jnp.int32, (tn, hwp), 1) % width
    not_left = col != 0            # the kw=0 tap reads column w-1
    not_right = col != width - 1   # the kw=2 tap reads column w+1

    # Tap-outer accumulation: 27 slice+mask ops, 81 MACs, ~6 live (tn, hwp) values (no spills).
    accs = [None] * C
    for ci in range(C):
        for kh in range(K):
            for kw in range(K):
                start = pad + (kh - 1) * width + (kw - 1)
                t = pad_ref[ci, :, start:start + hwp]
                if kw == 0:
                    t = jnp.where(not_left, t, 0.0)
                elif kw == K - 1:
                    t = jnp.where(not_right, t, 0.0)
                for co in range(C):
                    wgt = w_ref[((co * C + ci) * K + kh) * K + kw]
                    contrib = wgt * t
                    accs[co] = contrib if accs[co] is None else accs[co] + contrib

    # relu2(conv2(x) + b2) + x, one lane-dense (tn, hwp) channel slab at a time.
    for co in range(C):
        res = x_ref[co].astype(jnp.float32)
        o_ref[co] = (jnp.maximum(accs[co] + b_ref[co], 0.0) + res).astype(o_ref.dtype)


def simple_residual_block(x, w2, b2, *, tile_n=TILE_N):
    """x: (N, 3, H, W) float32 NCHW.  w2: (3, 3, 3, 3) OIHW.  b2: (3,)."""
    n, cx, h, w = x.shape
    assert cx == C
    hw = h * w
    hwp = 128 * pl.cdiv(hw, 128)          # lane-dense flattened spatial extent
    pad = 128 * pl.cdiv(w + 1, 128)       # 128-aligned halo margin, >= w+1
    n_pad = tile_n * pl.cdiv(n, tile_n)   # sublane-dense batch tiles

    # Channel-major, flattened, zero-padded working layout: (C, N_pad, HWP).
    x_cm = jnp.transpose(x, (1, 0, 2, 3)).reshape(C, n, hw)
    x_cm = jnp.pad(x_cm, ((0, 0), (0, n_pad - n), (0, hwp - hw)))
    w_flat = w2.reshape(-1).astype(jnp.float32)
    b = b2.astype(jnp.float32)

    grid = (n_pad // tile_n,)
    flops = 2 * n_pad * C * C * K * K * hwp + 3 * n_pad * C * hwp
    bytes_accessed = 2 * C * n_pad * hwp * 4 + (C * C * K * K + C) * 4

    out_cm = pl.pallas_call(
        functools.partial(_res_block_kernel, width=w),
        out_shape=jax.ShapeDtypeStruct((C, n_pad, hwp), x.dtype),
        grid_spec=pltpu.PrefetchScalarGridSpec(
            num_scalar_prefetch=0,
            grid=grid,
            in_specs=[
                pl.BlockSpec((C, tile_n, hwp), lambda i: (0, i, 0)),   # x tile (VMEM)
                pl.BlockSpec(memory_space=pltpu.MemorySpace.SMEM),     # conv2 weights (scalars)
                pl.BlockSpec(memory_space=pltpu.MemorySpace.SMEM),     # conv2 bias (scalars)
            ],
            out_specs=pl.BlockSpec((C, tile_n, hwp), lambda i: (0, i, 0)),
            scratch_shapes=[pltpu.VMEM((C, tile_n, hwp + 2 * pad), jnp.float32)],
        ),
        compiler_params=pltpu.CompilerParams(
            # v7x: shard the independent batch tiles across both TensorCores; no-op on v5e/v6e.
            dimension_semantics=("parallel",),
        ),
        cost_estimate=pl.CostEstimate(
            flops=flops, transcendentals=0, bytes_accessed=bytes_accessed),
    )(x_cm, w_flat, b)

    out = out_cm[:, :n, :hw].reshape(C, n, h, w)
    return jnp.transpose(out, (1, 0, 2, 3))


def _reference(x, w2, b2):
    conv = lax.conv_general_dilated(
        x, w2, window_strides=(1, 1), padding="SAME",
        dimension_numbers=("NCHW", "OIHW", "NCHW"))
    conv = conv + b2[None, :, None, None]
    return jax.nn.relu(conv) + x


if __name__ == "__main__":
    key = jax.random.PRNGKey(0)
    kx, kw1, kb1, kw2, kb2 = jax.random.split(key, 5)

    # Small CIFAR-like input.  Batch of 8 = one full sublane group per tile (the wrapper pads
    # smaller batches up to TILE_N internally, so N=2 also works).
    N, H, W = 8, 16, 16
    x = jax.random.normal(kx, (N, C, H, W), dtype=jnp.float32)

    # Parameter init (shapes from nn.Conv2d(3, 3, 3, padding=1)).
    # conv1 parameters exist in the module but its output is discarded in forward (dead path);
    # they are allocated for fidelity but never used in the computation.
    fan_in = C * K * K
    bound = 1.0 / jnp.sqrt(fan_in)
    w1 = jax.random.uniform(kw1, (C, C, K, K), jnp.float32, -bound, bound)  # unused (dead path)
    b1 = jax.random.uniform(kb1, (C,), jnp.float32, -bound, bound)          # unused (dead path)
    w2 = jax.random.uniform(kw2, (C, C, K, K), jnp.float32, -bound, bound)
    b2 = jax.random.uniform(kb2, (C,), jnp.float32, -bound, bound)

    out = simple_residual_block(x, w2, b2)
    out = jax.block_until_ready(out)

    ref = _reference(x, w2, b2)
    assert out.shape == (N, C, H, W)
    assert jnp.allclose(out, ref, atol=1e-5, rtol=1e-5), "mismatch vs reference"

    print("KERNEL_OK")
</pallas_src>

<mosaic_0001>
module attributes {stable_mosaic.version = 11 : i64} {
  func.func @_res_block_kernel(%arg0: i32, %arg1: memref<3x8x256xf32, #tpu.memory_space<vmem>>, %arg2: memref<81xf32, #tpu.memory_space<smem>>, %arg3: memref<3xf32, #tpu.memory_space<smem>>, %arg4: memref<3x8x256xf32, #tpu.memory_space<vmem>>, %arg5: memref<3x8x512xf32, #tpu.memory_space<vmem>>) attributes {dimension_semantics = [#tpu.dimension_semantics<parallel>], iteration_bounds = array<i64: 1>, scalar_prefetch = 0 : i64, scratch_operands = 1 : i64, tpu.core_type = #tpu.core_type<tc>, window_params = [{transform_indices = @transform_0, window_bounds = array<i64: 3, 8, 256>}, {transform_indices = @transform_1, window_bounds = array<i64: 81>}, {transform_indices = @transform_2, window_bounds = array<i64: 3>}, {transform_indices = @transform_3, window_bounds = array<i64: 3, 8, 256>}]} {
    %cst = arith.constant 0.000000e+00 : f32
    %0 = vector.broadcast %cst : f32 to vector<3x8x128xf32>
    %c0 = arith.constant 0 : index
    %c0_0 = arith.constant 0 : index
    %c0_1 = arith.constant 0 : index
    %1 = vector.load %arg5[%c0, %c0_0, %c0_1] : memref<3x8x512xf32, #tpu.memory_space<vmem>>, vector<3x8x128xf32>
    tpu.vector_store %arg5[%c0, %c0_0, %c0_1], %0 {strides = array<i32>} : memref<3x8x512xf32, #tpu.memory_space<vmem>>, vector<3x8x128xf32>,
    %c0_2 = arith.constant 0 : index
    %c0_3 = arith.constant 0 : index
    %c384 = arith.constant 384 : index
    %2 = vector.load %arg5[%c0_2, %c0_3, %c384] : memref<3x8x512xf32, #tpu.memory_space<vmem>>, vector<3x8x128xf32>
    tpu.vector_store %arg5[%c0_2, %c0_3, %c384], %0 {strides = array<i32>} : memref<3x8x512xf32, #tpu.memory_space<vmem>>, vector<3x8x128xf32>,
    %c0_4 = arith.constant 0 : index
    %c0_5 = arith.constant 0 : index
    %c0_6 = arith.constant 0 : index
    %3 = vector.load %arg1[%c0_4, %c0_5, %c0_6] : memref<3x8x256xf32, #tpu.memory_space<vmem>>, vector<3x8x256xf32>
    %c0_7 = arith.constant 0 : index
    %c0_8 = arith.constant 0 : index
    %c128 = arith.constant 128 : index
    %4 = vector.load %arg5[%c0_7, %c0_8, %c128] : memref<3x8x512xf32, #tpu.memory_space<vmem>>, vector<3x8x256xf32>
    tpu.vector_store %arg5[%c0_7, %c0_8, %c128], %3 {strides = array<i32>} : memref<3x8x512xf32, #tpu.memory_space<vmem>>, vector<3x8x256xf32>,
    %5 = tpu.iota {dimensions = array<i32: 1>} : vector<8x256xi32>
    %c16_i32 = arith.constant 16 : i32
    %c0_i32 = arith.constant 0 : i32
    %6 = arith.cmpi eq, %c16_i32, %c0_i32 : i32
    %c1_i32 = arith.constant 1 : i32
    %7 = arith.select %6, %c1_i32, %c16_i32 : i32
    %8 = vector.broadcast %7 : i32 to vector<8x256xi32>
    %9 = arith.remsi %5, %8 : vector<8x256xi32>
    %c0_i32_9 = arith.constant 0 : i32
    %10 = vector.broadcast %c0_i32_9 : i32 to vector<8x256xi32>
    %11 = arith.cmpi ne, %9, %10 : vector<8x256xi32>
    %c0_i32_10 = arith.constant 0 : i32
    %12 = vector.broadcast %c0_i32_10 : i32 to vector<8x256xi32>
    %13 = arith.cmpi slt, %9, %12 : vector<8x256xi32>
    %c0_i32_11 = arith.constant 0 : i32
    %14 = arith.cmpi slt, %7, %c0_i32_11 : i32
    %15 = vector.broadcast %14 : i1 to vector<8x256xi1>
    %16 = vector.broadcast %15 : vector<8x256xi1> to vector<8x256xi1>
    %17 = arith.xori %13, %16 : vector<8x256xi1>
    %18 = arith.andi %17, %11 : vector<8x256xi1>
    %19 = vector.broadcast %7 : i32 to vector<8x256xi32>
    %20 = arith.addi %9, %19 : vector<8x256xi32>
    %21 = arith.select %18, %20, %9 : vector<8x256xi1>, vector<8x256xi32>
    %c0_i32_12 = arith.constant 0 : i32
    %22 = vector.broadcast %c0_i32_12 : i32 to vector<8x256xi32>
    %23 = arith.cmpi ne, %21, %22 : vector<8x256xi32>
    %c15_i32 = arith.constant 15 : i32
    %24 = vector.broadcast %c15_i32 : i32 to vector<8x256xi32>
    %25 = arith.cmpi ne, %21, %24 : vector<8x256xi32>
    %c0_13 = arith.constant 0 : index
    %c0_14 = arith.constant 0 : index
    %c111 = arith.constant 111 : index
    %26 = vector.load %arg5[%c0_13, %c0_14, %c111] : memref<3x8x512xf32, #tpu.memory_space<vmem>>, vector<1x8x256xf32>
    %27 = vector.shape_cast %26 : vector<1x8x256xf32> to vector<8x256xf32>
    %cst_15 = arith.constant 0.000000e+00 : f32
    %28 = vector.broadcast %cst_15 : f32 to vector<8x256xf32>
    %29 = arith.select %23, %27, %28 : vector<8x256xi1>, vector<8x256xf32>
    %c0_16 = arith.constant 0 : index
    %30 = memref.load %arg2[%c0_16] : memref<81xf32, #tpu.memory_space<smem>>
    %31 = vector.broadcast %30 : f32 to vector<8x256xf32>
    %32 = arith.mulf %31, %29 : vector<8x256xf32>
    %c27 = arith.constant 27 : index
    %33 = memref.load %arg2[%c27] : memref<81xf32, #tpu.memory_space<smem>>
    %34 = vector.broadcast %33 : f32 to vector<8x256xf32>
    %35 = arith.mulf %34, %29 : vector<8x256xf32>
    %c54 = arith.constant 54 : index
    %36 = memref.load %arg2[%c54] : memref<81xf32, #tpu.memory_space<smem>>
    %37 = vector.broadcast %36 : f32 to vector<8x256xf32>
    %38 = arith.mulf %37, %29 : vector<8x256xf32>
    %c0_17 = arith.constant 0 : index
    %c0_18 = arith.constant 0 : index
    %c112 = arith.constant 112 : index
    %39 = vector.load %arg5[%c0_17, %c0_18, %c112] : memref<3x8x512xf32, #tpu.memory_space<vmem>>, vector<1x8x256xf32>
    %40 = vector.shape_cast %39 : vector<1x8x256xf32> to vector<8x256xf32>
    %c1 = arith.constant 1 : index
    %41 = memref.load %arg2[%c1] : memref<81xf32, #tpu.memory_space<smem>>
    %42 = vector.broadcast %41 : f32 to vector<8x256xf32>
    %43 = arith.mulf %42, %40 : vector<8x256xf32>
    %44 = arith.addf %32, %43 : vector<8x256xf32>
    %c28 = arith.constant 28 : index
    %45 = memref.load %arg2[%c28] : memref<81xf32, #tpu.memory_space<smem>>
    %46 = vector.broadcast %45 : f32 to vector<8x256xf32>
    %47 = arith.mulf %46, %40 : vector<8x256xf32>
    %48 = arith.addf %35, %47 : vector<8x256xf32>
    %c55 = arith.constant 55 : index
    %49 = memref.load %arg2[%c55] : memref<81xf32, #tpu.memory_space<smem>>
    %50 = vector.broadcast %49 : f32 to vector<8x256xf32>
    %51 = arith.mulf %50, %40 : vector<8x256xf32>
    %52 = arith.addf %38, %51 : vector<8x256xf32>
    %c0_19 = arith.constant 0 : index
    %c0_20 = arith.constant 0 : index
    %c113 = arith.constant 113 : index
    %53 = vector.load %arg5[%c0_19, %c0_20, %c113] : memref<3x8x512xf32, #tpu.memory_space<vmem>>, vector<1x8x256xf32>
    %54 = vector.shape_cast %53 : vector<1x8x256xf32> to vector<8x256xf32>
    %cst_21 = arith.constant 0.000000e+00 : f32
    %55 = vector.broadcast %cst_21 : f32 to vector<8x256xf32>
    %56 = arith.select %25, %54, %55 : vector<8x256xi1>, vector<8x256xf32>
    %c2 = arith.constant 2 : index
    %57 = memref.load %arg2[%c2] : memref<81xf32, #tpu.memory_space<smem>>
    %58 = vector.broadcast %57 : f32 to vector<8x256xf32>
    %59 = arith.mulf %58, %56 : vector<8x256xf32>
    %60 = arith.addf %44, %59 : vector<8x256xf32>
    %c29 = arith.constant 29 : index
    %61 = memref.load %arg2[%c29] : memref<81xf32, #tpu.memory_space<smem>>
    %62 = vector.broadcast %61 : f32 to vector<8x256xf32>
    %63 = arith.mulf %62, %56 : vector<8x256xf32>
    %64 = arith.addf %48, %63 : vector<8x256xf32>
    %c56 = arith.constant 56 : index
    %65 = memref.load %arg2[%c56] : memref<81xf32, #tpu.memory_space<smem>>
    %66 = vector.broadcast %65 : f32 to vector<8x256xf32>
    %67 = arith.mulf %66, %56 : vector<8x256xf32>
    %68 = arith.addf %52, %67 : vector<8x256xf32>
    %c0_22 = arith.constant 0 : index
    %c0_23 = arith.constant 0 : index
    %c127 = arith.constant 127 : index
    %69 = vector.load %arg5[%c0_22, %c0_23, %c127] : memref<3x8x512xf32, #tpu.memory_space<vmem>>, vector<1x8x256xf32>
    %70 = vector.shape_cast %69 : vector<1x8x256xf32> to vector<8x256xf32>
    %cst_24 = arith.constant 0.000000e+00 : f32
    %71 = vector.broadcast %cst_24 : f32 to vector<8x256xf32>
    %72 = arith.select %23, %70, %71 : vector<8x256xi1>, vector<8x256xf32>
    %c3 = arith.constant 3 : index
    %73 = memref.load %arg2[%c3] : memref<81xf32, #tpu.memory_space<smem>>
    %74 = vector.broadcast %73 : f32 to vector<8x256xf32>
    %75 = arith.mulf %74, %72 : vector<8x256xf32>
    %76 = arith.addf %60, %75 : vector<8x256xf32>
    %c30 = arith.constant 30 : index
    %77 = memref.load %arg2[%c30] : memref<81xf32, #tpu.memory_space<smem>>
    %78 = vector.broadcast %77 : f32 to vector<8x256xf32>
    %79 = arith.mulf %78, %72 : vector<8x256xf32>
    %80 = arith.addf %64, %79 : vector<8x256xf32>
    %c57 = arith.constant 57 : index
    %81 = memref.load %arg2[%c57] : memref<81xf32, #tpu.memory_space<smem>>
    %82 = vector.broadcast %81 : f32 to vector<8x256xf32>
    %83 = arith.mulf %82, %72 : vector<8x256xf32>
    %84 = arith.addf %68, %83 : vector<8x256xf32>
    %c0_25 = arith.constant 0 : index
    %c0_26 = arith.constant 0 : index
    %c128_27 = arith.constant 128 : index
    %85 = vector.load %arg5[%c0_25, %c0_26, %c128_27] : memref<3x8x512xf32, #tpu.memory_space<vmem>>, vector<1x8x256xf32>
    %86 = vector.shape_cast %85 : vector<1x8x256xf32> to vector<8x256xf32>
    %c4 = arith.constant 4 : index
    %87 = memref.load %arg2[%c4] : memref<81xf32, #tpu.memory_space<smem>>
    %88 = vector.broadcast %87 : f32 to vector<8x256xf32>
    %89 = arith.mulf %88, %86 : vector<8x256xf32>
    %90 = arith.addf %76, %89 : vector<8x256xf32>
    %c31 = arith.constant 31 : index
    %91 = memref.load %arg2[%c31] : memref<81xf32, #tpu.memory_space<smem>>
    %92 = vector.broadcast %91 : f32 to vector<8x256xf32>
    %93 = arith.mulf %92, %86 : vector<8x256xf32>
    %94 = arith.addf %80, %93 : vector<8x256xf32>
    %c58 = arith.constant 58 : index
    %95 = memref.load %arg2[%c58] : memref<81xf32, #tpu.memory_space<smem>>
    %96 = vector.broadcast %95 : f32 to vector<8x256xf32>
    %97 = arith.mulf %96, %86 : vector<8x256xf32>
    %98 = arith.addf %84, %97 : vector<8x256xf32>
    %c0_28 = arith.constant 0 : index
    %c0_29 = arith.constant 0 : index
    %c129 = arith.constant 129 : index
    %99 = vector.load %arg5[%c0_28, %c0_29, %c129] : memref<3x8x512xf32, #tpu.memory_space<vmem>>, vector<1x8x256xf32>
    %100 = vector.shape_cast %99 : vector<1x8x256xf32> to vector<8x256xf32>
    %cst_30 = arith.constant 0.000000e+00 : f32
    %101 = vector.broadcast %cst_30 : f32 to vector<8x256xf32>
    %102 = arith.select %25, %100, %101 : vector<8x256xi1>, vector<8x256xf32>
    %c5 = arith.constant 5 : index
    %103 = memref.load %arg2[%c5] : memref<81xf32, #tpu.memory_space<smem>>
    %104 = vector.broadcast %103 : f32 to vector<8x256xf32>
    %105 = arith.mulf %104, %102 : vector<8x256xf32>
    %106 = arith.addf %90, %105 : vector<8x256xf32>
    %c32 = arith.constant 32 : index
    %107 = memref.load %arg2[%c32] : memref<81xf32, #tpu.memory_space<smem>>
    %108 = vector.broadcast %107 : f32 to vector<8x256xf32>
    %109 = arith.mulf %108, %102 : vector<8x256xf32>
    %110 = arith.addf %94, %109 : vector<8x256xf32>
    %c59 = arith.constant 59 : index
    %111 = memref.load %arg2[%c59] : memref<81xf32, #tpu.memory_space<smem>>
    %112 = vector.broadcast %111 : f32 to vector<8x256xf32>
    %113 = arith.mulf %112, %102 : vector<8x256xf32>
    %114 = arith.addf %98, %113 : vector<8x256xf32>
    %c0_31 = arith.constant 0 : index
    %c0_32 = arith.constant 0 : index
    %c143 = arith.constant 143 : index
    %115 = vector.load %arg5[%c0_31, %c0_32, %c143] : memref<3x8x512xf32, #tpu.memory_space<vmem>>, vector<1x8x256xf32>
    %116 = vector.shape_cast %115 : vector<1x8x256xf32> to vector<8x256xf32>
    %cst_33 = arith.constant 0.000000e+00 : f32
    %117 = vector.broadcast %cst_33 : f32 to vector<8x256xf32>
    %118 = arith.select %23, %116, %117 : vector<8x256xi1>, vector<8x256xf32>
    %c6 = arith.constant 6 : index
    %119 = memref.load %arg2[%c6] : memref<81xf32, #tpu.memory_space<smem>>
    %120 = vector.broadcast %119 : f32 to vector<8x256xf32>
    %121 = arith.mulf %120, %118 : vector<8x256xf32>
    %122 = arith.addf %106, %121 : vector<8x256xf32>
    %c33 = arith.constant 33 : index
    %123 = memref.load %arg2[%c33] : memref<81xf32, #tpu.memory_space<smem>>
    %124 = vector.broadcast %123 : f32 to vector<8x256xf32>
    %125 = arith.mulf %124, %118 : vector<8x256xf32>
    %126 = arith.addf %110, %125 : vector<8x256xf32>
    %c60 = arith.constant 60 : index
    %127 = memref.load %arg2[%c60] : memref<81xf32, #tpu.memory_space<smem>>
    %128 = vector.broadcast %127 : f32 to vector<8x256xf32>
    %129 = arith.mulf %128, %118 : vector<8x256xf32>
    %130 = arith.addf %114, %129 : vector<8x256xf32>
    %c0_34 = arith.constant 0 : index
    %c0_35 = arith.constant 0 : index
    %c144 = arith.constant 144 : index
    %131 = vector.load %arg5[%c0_34, %c0_35, %c144] : memref<3x8x512xf32, #tpu.memory_space<vmem>>, vector<1x8x256xf32>
    %132 = vector.shape_cast %131 : vector<1x8x256xf32> to vector<8x256xf32>
    %c7 = arith.constant 7 : index
    %133 = memref.load %arg2[%c7] : memref<81xf32, #tpu.memory_space<smem>>
    %134 = vector.broadcast %133 : f32 to vector<8x256xf32>
    %135 = arith.mulf %134, %132 : vector<8x256xf32>
    %136 = arith.addf %122, %135 : vector<8x256xf32>
    %c34 = arith.constant 34 : index
    %137 = memref.load %arg2[%c34] : memref<81xf32, #tpu.memory_space<smem>>
    %138 = vector.broadcast %137 : f32 to vector<8x256xf32>
    %139 = arith.mulf %138, %132 : vector<8x256xf32>
    %140 = arith.addf %126, %139 : vector<8x256xf32>
    %c61 = arith.constant 61 : index
    %141 = memref.load %arg2[%c61] : memref<81xf32, #tpu.memory_space<smem>>
    %142 = vector.broadcast %141 : f32 to vector<8x256xf32>
    %143 = arith.mulf %142, %132 : vector<8x256xf32>
    %144 = arith.addf %130, %143 : vector<8x256xf32>
    %c0_36 = arith.constant 0 : index
    %c0_37 = arith.constant 0 : index
    %c145 = arith.constant 145 : index
    %145 = vector.load %arg5[%c0_36, %c0_37, %c145] : memref<3x8x512xf32, #tpu.memory_space<vmem>>, vector<1x8x256xf32>
    %146 = vector.shape_cast %145 : vector<1x8x256xf32> to vector<8x256xf32>
    %cst_38 = arith.constant 0.000000e+00 : f32
    %147 = vector.broadcast %cst_38 : f32 to vector<8x256xf32>
    %148 = arith.select %25, %146, %147 : vector<8x256xi1>, vector<8x256xf32>
    %c8 = arith.constant 8 : index
    %149 = memref.load %arg2[%c8] : memref<81xf32, #tpu.memory_space<smem>>
    %150 = vector.broadcast %149 : f32 to vector<8x256xf32>
    %151 = arith.mulf %150, %148 : vector<8x256xf32>
    %152 = arith.addf %136, %151 : vector<8x256xf32>
    %c35 = arith.constant 35 : index
    %153 = memref.load %arg2[%c35] : memref<81xf32, #tpu.memory_space<smem>>
    %154 = vector.broadcast %153 : f32 to vector<8x256xf32>
    %155 = arith.mulf %154, %148 : vector<8x256xf32>
    %156 = arith.addf %140, %155 : vector<8x256xf32>
    %c62 = arith.constant 62 : index
    %157 = memref.load %arg2[%c62] : memref<81xf32, #tpu.memory_space<smem>>
    %158 = vector.broadcast %157 : f32 to vector<8x256xf32>
    %159 = arith.mulf %158, %148 : vector<8x256xf32>
    %160 = arith.addf %144, %159 : vector<8x256xf32>
    %c1_39 = arith.constant 1 : index
    %c0_40 = arith.constant 0 : index
    %c111_41 = arith.constant 111 : index
    %161 = vector.load %arg5[%c1_39, %c0_40, %c111_41] : memref<3x8x512xf32, #tpu.memory_space<vmem>>, vector<1x8x256xf32>
    %162 = vector.shape_cast %161 : vector<1x8x256xf32> to vector<8x256xf32>
    %cst_42 = arith.constant 0.000000e+00 : f32
    %163 = vector.broadcast %cst_42 : f32 to vector<8x256xf32>
    %164 = arith.select %23, %162, %163 : vector<8x256xi1>, vector<8x256xf32>
    %c9 = arith.constant 9 : index
    %165 = memref.load %arg2[%c9] : memref<81xf32, #tpu.memory_space<smem>>
    %166 = vector.broadcast %165 : f32 to vector<8x256xf32>
    %167 = arith.mulf %166, %164 : vector<8x256xf32>
    %168 = arith.addf %152, %167 : vector<8x256xf32>
    %c36 = arith.constant 36 : index
    %169 = memref.load %arg2[%c36] : memref<81xf32, #tpu.memory_space<smem>>
    %170 = vector.broadcast %169 : f32 to vector<8x256xf32>
    %171 = arith.mulf %170, %164 : vector<8x256xf32>
    %172 = arith.addf %156, %171 : vector<8x256xf32>
    %c63 = arith.constant 63 : index
    %173 = memref.load %arg2[%c63] : memref<81xf32, #tpu.memory_space<smem>>
    %174 = vector.broadcast %173 : f32 to vector<8x256xf32>
    %175 = arith.mulf %174, %164 : vector<8x256xf32>
    %176 = arith.addf %160, %175 : vector<8x256xf32>
    %c1_43 = arith.constant 1 : index
    %c0_44 = arith.constant 0 : index
    %c112_45 = arith.constant 112 : index
    %177 = vector.load %arg5[%c1_43, %c0_44, %c112_45] : memref<3x8x512xf32, #tpu.memory_space<vmem>>, vector<1x8x256xf32>
    %178 = vector.shape_cast %177 : vector<1x8x256xf32> to vector<8x256xf32>
    %c10 = arith.constant 10 : index
    %179 = memref.load %arg2[%c10] : memref<81xf32, #tpu.memory_space<smem>>
    %180 = vector.broadcast %179 : f32 to vector<8x256xf32>
    %181 = arith.mulf %180, %178 : vector<8x256xf32>
    %182 = arith.addf %168, %181 : vector<8x256xf32>
    %c37 = arith.constant 37 : index
    %183 = memref.load %arg2[%c37] : memref<81xf32, #tpu.memory_space<smem>>
    %184 = vector.broadcast %183 : f32 to vector<8x256xf32>
    %185 = arith.mulf %184, %178 : vector<8x256xf32>
    %186 = arith.addf %172, %185 : vector<8x256xf32>
    %c64 = arith.constant 64 : index
    %187 = memref.load %arg2[%c64] : memref<81xf32, #tpu.memory_space<smem>>
    %188 = vector.broadcast %187 : f32 to vector<8x256xf32>
    %189 = arith.mulf %188, %178 : vector<8x256xf32>
    %190 = arith.addf %176, %189 : vector<8x256xf32>
    %c1_46 = arith.constant 1 : index
    %c0_47 = arith.constant 0 : index
    %c113_48 = arith.constant 113 : index
    %191 = vector.load %arg5[%c1_46, %c0_47, %c113_48] : memref<3x8x512xf32, #tpu.memory_space<vmem>>, vector<1x8x256xf32>
    %192 = vector.shape_cast %191 : vector<1x8x256xf32> to vector<8x256xf32>
    %cst_49 = arith.constant 0.000000e+00 : f32
    %193 = vector.broadcast %cst_49 : f32 to vector<8x256xf32>
    %194 = arith.select %25, %192, %193 : vector<8x256xi1>, vector<8x256xf32>
    %c11 = arith.constant 11 : index
    %195 = memref.load %arg2[%c11] : memref<81xf32, #tpu.memory_space<smem>>
    %196 = vector.broadcast %195 : f32 to vector<8x256xf32>
    %197 = arith.mulf %196, %194 : vector<8x256xf32>
    %198 = arith.addf %182, %197 : vector<8x256xf32>
    %c38 = arith.constant 38 : index
    %199 = memref.load %arg2[%c38] : memref<81xf32, #tpu.memory_space<smem>>
    %200 = vector.broadcast %199 : f32 to vector<8x256xf32>
    %201 = arith.mulf %200, %194 : vector<8x256xf32>
    %202 = arith.addf %186, %201 : vector<8x256xf32>
    %c65 = arith.constant 65 : index
    %203 = memref.load %arg2[%c65] : memref<81xf32, #tpu.memory_space<smem>>
    %204 = vector.broadcast %203 : f32 to vector<8x256xf32>
    %205 = arith.mulf %204, %194 : vector<8x256xf32>
    %206 = arith.addf %190, %205 : vector<8x256xf32>
    %c1_50 = arith.constant 1 : index
    %c0_51 = arith.constant 0 : index
    %c127_52 = arith.constant 127 : index
    %207 = vector.load %arg5[%c1_50, %c0_51, %c127_52] : memref<3x8x512xf32, #tpu.memory_space<vmem>>, vector<1x8x256xf32>
    %208 = vector.shape_cast %207 : vector<1x8x256xf32> to vector<8x256xf32>
    %cst_53 = arith.constant 0.000000e+00 : f32
    %209 = vector.broadcast %cst_53 : f32 to vector<8x256xf32>
    %210 = arith.select %23, %208, %209 : vector<8x256xi1>, vector<8x256xf32>
    %c12 = arith.constant 12 : index
    %211 = memref.load %arg2[%c12] : memref<81xf32, #tpu.memory_space<smem>>
    %212 = vector.broadcast %211 : f32 to vector<8x256xf32>
    %213 = arith.mulf %212, %210 : vector<8x256xf32>
    %214 = arith.addf %198, %213 : vector<8x256xf32>
    %c39 = arith.constant 39 : index
    %215 = memref.load %arg2[%c39] : memref<81xf32, #tpu.memory_space<smem>>
    %216 = vector.broadcast %215 : f32 to vector<8x256xf32>
    %217 = arith.mulf %216, %210 : vector<8x256xf32>
    %218 = arith.addf %202, %217 : vector<8x256xf32>
    %c66 = arith.constant 66 : index
    %219 = memref.load %arg2[%c66] : memref<81xf32, #tpu.memory_space<smem>>
    %220 = vector.broadcast %219 : f32 to vector<8x256xf32>
    %221 = arith.mulf %220, %210 : vector<8x256xf32>
    %222 = arith.addf %206, %221 : vector<8x256xf32>
    %c1_54 = arith.constant 1 : index
    %c0_55 = arith.constant 0 : index
    %c128_56 = arith.constant 128 : index
    %223 = vector.load %arg5[%c1_54, %c0_55, %c128_56] : memref<3x8x512xf32, #tpu.memory_space<vmem>>, vector<1x8x256xf32>
    %224 = vector.shape_cast %223 : vector<1x8x256xf32> to vector<8x256xf32>
    %c13 = arith.constant 13 : index
    %225 = memref.load %arg2[%c13] : memref<81xf32, #tpu.memory_space<smem>>
    %226 = vector.broadcast %225 : f32 to vector<8x256xf32>
    %227 = arith.mulf %226, %224 : vector<8x256xf32>
    %228 = arith.addf %214, %227 : vector<8x256xf32>
    %c40 = arith.constant 40 : index
    %229 = memref.load %arg2[%c40] : memref<81xf32, #tpu.memory_space<smem>>
    %230 = vector.broadcast %229 : f32 to vector<8x256xf32>
    %231 = arith.mulf %230, %224 : vector<8x256xf32>
    %232 = arith.addf %218, %231 : vector<8x256xf32>
    %c67 = arith.constant 67 : index
    %233 = memref.load %arg2[%c67] : memref<81xf32, #tpu.memory_space<smem>>
    %234 = vector.broadcast %233 : f32 to vector<8x256xf32>
    %235 = arith.mulf %234, %224 : vector<8x256xf32>
    %236 = arith.addf %222, %235 : vector<8x256xf32>
    %c1_57 = arith.constant 1 : index
    %c0_58 = arith.constant 0 : index
    %c129_59 = arith.constant 129 : index
    %237 = vector.load %arg5[%c1_57, %c0_58, %c129_59] : memref<3x8x512xf32, #tpu.memory_space<vmem>>, vector<1x8x256xf32>
    %238 = vector.shape_cast %237 : vector<1x8x256xf32> to vector<8x256xf32>
    %cst_60 = arith.constant 0.000000e+00 : f32
    %239 = vector.broadcast %cst_60 : f32 to vector<8x256xf32>
    %240 = arith.select %25, %238, %239 : vector<8x256xi1>, vector<8x256xf32>
    %c14 = arith.constant 14 : index
    %241 = memref.load %arg2[%c14] : memref<81xf32, #tpu.memory_space<smem>>
    %242 = vector.broadcast %241 : f32 to vector<8x256xf32>
    %243 = arith.mulf %242, %240 : vector<8x256xf32>
    %244 = arith.addf %228, %243 : vector<8x256xf32>
    %c41 = arith.constant 41 : index
    %245 = memref.load %arg2[%c41] : memref<81xf32, #tpu.memory_space<smem>>
    %246 = vector.broadcast %245 : f32 to vector<8x256xf32>
    %247 = arith.mulf %246, %240 : vector<8x256xf32>
    %248 = arith.addf %232, %247 : vector<8x256xf32>
    %c68 = arith.constant 68 : index
    %249 = memref.load %arg2[%c68] : memref<81xf32, #tpu.memory_space<smem>>
    %250 = vector.broadcast %249 : f32 to vector<8x256xf32>
    %251 = arith.mulf %250, %240 : vector<8x256xf32>
    %252 = arith.addf %236, %251 : vector<8x256xf32>
    %c1_61 = arith.constant 1 : index
    %c0_62 = arith.constant 0 : index
    %c143_63 = arith.constant 143 : index
    %253 = vector.load %arg5[%c1_61, %c0_62, %c143_63] : memref<3x8x512xf32, #tpu.memory_space<vmem>>, vector<1x8x256xf32>
    %254 = vector.shape_cast %253 : vector<1x8x256xf32> to vector<8x256xf32>
    %cst_64 = arith.constant 0.000000e+00 : f32
    %255 = vector.broadcast %cst_64 : f32 to vector<8x256xf32>
    %256 = arith.select %23, %254, %255 : vector<8x256xi1>, vector<8x256xf32>
    %c15 = arith.constant 15 : index
    %257 = memref.load %arg2[%c15] : memref<81xf32, #tpu.memory_space<smem>>
    %258 = vector.broadcast %257 : f32 to vector<8x256xf32>
    %259 = arith.mulf %258, %256 : vector<8x256xf32>
    %260 = arith.addf %244, %259 : vector<8x256xf32>
    %c42 = arith.constant 42 : index
    %261 = memref.load %arg2[%c42] : memref<81xf32, #tpu.memory_space<smem>>
    %262 = vector.broadcast %261 : f32 to vector<8x256xf32>
    %263 = arith.mulf %262, %256 : vector<8x256xf32>
    %264 = arith.addf %248, %263 : vector<8x256xf32>
    %c69 = arith.constant 69 : index
    %265 = memref.load %arg2[%c69] : memref<81xf32, #tpu.memory_space<smem>>
    %266 = vector.broadcast %265 : f32 to vector<8x256xf32>
    %267 = arith.mulf %266, %256 : vector<8x256xf32>
    %268 = arith.addf %252, %267 : vector<8x256xf32>
    %c1_65 = arith.constant 1 : index
    %c0_66 = arith.constant 0 : index
    %c144_67 = arith.constant 144 : index
    %269 = vector.load %arg5[%c1_65, %c0_66, %c144_67] : memref<3x8x512xf32, #tpu.memory_space<vmem>>, vector<1x8x256xf32>
    %270 = vector.shape_cast %269 : vector<1x8x256xf32> to vector<8x256xf32>
    %c16 = arith.constant 16 : index
    %271 = memref.load %arg2[%c16] : memref<81xf32, #tpu.memory_space<smem>>
    %272 = vector.broadcast %271 : f32 to vector<8x256xf32>
    %273 = arith.mulf %272, %270 : vector<8x256xf32>
    %274 = arith.addf %260, %273 : vector<8x256xf32>
    %c43 = arith.constant 43 : index
    %275 = memref.load %arg2[%c43] : memref<81xf32, #tpu.memory_space<smem>>
    %276 = vector.broadcast %275 : f32 to vector<8x256xf32>
    %277 = arith.mulf %276, %270 : vector<8x256xf32>
    %278 = arith.addf %264, %277 : vector<8x256xf32>
    %c70 = arith.constant 70 : index
    %279 = memref.load %arg2[%c70] : memref<81xf32, #tpu.memory_space<smem>>
    %280 = vector.broadcast %279 : f32 to vector<8x256xf32>
    %281 = arith.mulf %280, %270 : vector<8x256xf32>
    %282 = arith.addf %268, %281 : vector<8x256xf32>
    %c1_68 = arith.constant 1 : index
    %c0_69 = arith.constant 0 : index
    %c145_70 = arith.constant 145 : index
    %283 = vector.load %arg5[%c1_68, %c0_69, %c145_70] : memref<3x8x512xf32, #tpu.memory_space<vmem>>, vector<1x8x256xf32>
    %284 = vector.shape_cast %283 : vector<1x8x256xf32> to vector<8x256xf32>
    %cst_71 = arith.constant 0.000000e+00 : f32
    %285 = vector.broadcast %cst_71 : f32 to vector<8x256xf32>
    %286 = arith.select %25, %284, %285 : vector<8x256xi1>, vector<8x256xf32>
    %c17 = arith.constant 17 : index
    %287 = memref.load %arg2[%c17] : memref<81xf32, #tpu.memory_space<smem>>
    %288 = vector.broadcast %287 : f32 to vector<8x256xf32>
    %289 = arith.mulf %288, %286 : vector<8x256xf32>
    %290 = arith.addf %274, %289 : vector<8x256xf32>
    %c44 = arith.constant 44 : index
    %291 = memref.load %arg2[%c44] : memref<81xf32, #tpu.memory_space<smem>>
    %292 = vector.broadcast %291 : f32 to vector<8x256xf32>
    %293 = arith.mulf %292, %286 : vector<8x256xf32>
    %294 = arith.addf %278, %293 : vector<8x256xf32>
    %c71 = arith.constant 71 : index
    %295 = memref.load %arg2[%c71] : memref<81xf32, #tpu.memory_space<smem>>
    %296 = vector.broadcast %295 : f32 to vector<8x256xf32>
    %297 = arith.mulf %296, %286 : vector<8x256xf32>
    %298 = arith.addf %282, %297 : vector<8x256xf32>
    %c2_72 = arith.constant 2 : index
    %c0_73 = arith.constant 0 : index
    %c111_74 = arith.constant 111 : index
    %299 = vector.load %arg5[%c2_72, %c0_73, %c111_74] : memref<3x8x512xf32, #tpu.memory_space<vmem>>, vector<1x8x256xf32>
    %300 = vector.shape_cast %299 : vector<1x8x256xf32> to vector<8x256xf32>
    %cst_75 = arith.constant 0.000000e+00 : f32
    %301 = vector.broadcast %cst_75 : f32 to vector<8x256xf32>
    %302 = arith.select %23, %300, %301 : vector<8x256xi1>, vector<8x256xf32>
    %c18 = arith.constant 18 : index
    %303 = memref.load %arg2[%c18] : memref<81xf32, #tpu.memory_space<smem>>
    %304 = vector.broadcast %303 : f32 to vector<8x256xf32>
    %305 = arith.mulf %304, %302 : vector<8x256xf32>
    %306 = arith.addf %290, %305 : vector<8x256xf32>
    %c45 = arith.constant 45 : index
    %307 = memref.load %arg2[%c45] : memref<81xf32, #tpu.memory_space<smem>>
    %308 = vector.broadcast %307 : f32 to vector<8x256xf32>
    %309 = arith.mulf %308, %302 : vector<8x256xf32>
    %310 = arith.addf %294, %309 : vector<8x256xf32>
    %c72 = arith.constant 72 : index
    %311 = memref.load %arg2[%c72] : memref<81xf32, #tpu.memory_space<smem>>
    %312 = vector.broadcast %311 : f32 to vector<8x256xf32>
    %313 = arith.mulf %312, %302 : vector<8x256xf32>
    %314 = arith.addf %298, %313 : vector<8x256xf32>
    %c2_76 = arith.constant 2 : index
    %c0_77 = arith.constant 0 : index
    %c112_78 = arith.constant 112 : index
    %315 = vector.load %arg5[%c2_76, %c0_77, %c112_78] : memref<3x8x512xf32, #tpu.memory_space<vmem>>, vector<1x8x256xf32>
    %316 = vector.shape_cast %315 : vector<1x8x256xf32> to vector<8x256xf32>
    %c19 = arith.constant 19 : index
    %317 = memref.load %arg2[%c19] : memref<81xf32, #tpu.memory_space<smem>>
    %318 = vector.broadcast %317 : f32 to vector<8x256xf32>
    %319 = arith.mulf %318, %316 : vector<8x256xf32>
    %320 = arith.addf %306, %319 : vector<8x256xf32>
    %c46 = arith.constant 46 : index
    %321 = memref.load %arg2[%c46] : memref<81xf32, #tpu.memory_space<smem>>
    %322 = vector.broadcast %321 : f32 to vector<8x256xf32>
    %323 = arith.mulf %322, %316 : vector<8x256xf32>
    %324 = arith.addf %310, %323 : vector<8x256xf32>
    %c73 = arith.constant 73 : index
    %325 = memref.load %arg2[%c73] : memref<81xf32, #tpu.memory_space<smem>>
    %326 = vector.broadcast %325 : f32 to vector<8x256xf32>
    %327 = arith.mulf %326, %316 : vector<8x256xf32>
    %328 = arith.addf %314, %327 : vector<8x256xf32>
    %c2_79 = arith.constant 2 : index
    %c0_80 = arith.constant 0 : index
    %c113_81 = arith.constant 113 : index
    %329 = vector.load %arg5[%c2_79, %c0_80, %c113_81] : memref<3x8x512xf32, #tpu.memory_space<vmem>>, vector<1x8x256xf32>
    %330 = vector.shape_cast %329 : vector<1x8x256xf32> to vector<8x256xf32>
    %cst_82 = arith.constant 0.000000e+00 : f32
    %331 = vector.broadcast %cst_82 : f32 to vector<8x256xf32>
    %332 = arith.select %25, %330, %331 : vector<8x256xi1>, vector<8x256xf32>
    %c20 = arith.constant 20 : index
    %333 = memref.load %arg2[%c20] : memref<81xf32, #tpu.memory_space<smem>>
    %334 = vector.broadcast %333 : f32 to vector<8x256xf32>
    %335 = arith.mulf %334, %332 : vector<8x256xf32>
    %336 = arith.addf %320, %335 : vector<8x256xf32>
    %c47 = arith.constant 47 : index
    %337 = memref.load %arg2[%c47] : memref<81xf32, #tpu.memory_space<smem>>
    %338 = vector.broadcast %337 : f32 to vector<8x256xf32>
    %339 = arith.mulf %338, %332 : vector<8x256xf32>
    %340 = arith.addf %324, %339 : vector<8x256xf32>
    %c74 = arith.constant 74 : index
    %341 = memref.load %arg2[%c74] : memref<81xf32, #tpu.memory_space<smem>>
    %342 = vector.broadcast %341 : f32 to vector<8x256xf32>
    %343 = arith.mulf %342, %332 : vector<8x256xf32>
    %344 = arith.addf %328, %343 : vector<8x256xf32>
    %c2_83 = arith.constant 2 : index
    %c0_84 = arith.constant 0 : index
    %c127_85 = arith.constant 127 : index
    %345 = vector.load %arg5[%c2_83, %c0_84, %c127_85] : memref<3x8x512xf32, #tpu.memory_space<vmem>>, vector<1x8x256xf32>
    %346 = vector.shape_cast %345 : vector<1x8x256xf32> to vector<8x256xf32>
    %cst_86 = arith.constant 0.000000e+00 : f32
    %347 = vector.broadcast %cst_86 : f32 to vector<8x256xf32>
    %348 = arith.select %23, %346, %347 : vector<8x256xi1>, vector<8x256xf32>
    %c21 = arith.constant 21 : index
    %349 = memref.load %arg2[%c21] : memref<81xf32, #tpu.memory_space<smem>>
    %350 = vector.broadcast %349 : f32 to vector<8x256xf32>
    %351 = arith.mulf %350, %348 : vector<8x256xf32>
    %352 = arith.addf %336, %351 : vector<8x256xf32>
    %c48 = arith.constant 48 : index
    %353 = memref.load %arg2[%c48] : memref<81xf32, #tpu.memory_space<smem>>
    %354 = vector.broadcast %353 : f32 to vector<8x256xf32>
    %355 = arith.mulf %354, %348 : vector<8x256xf32>
    %356 = arith.addf %340, %355 : vector<8x256xf32>
    %c75 = arith.constant 75 : index
    %357 = memref.load %arg2[%c75] : memref<81xf32, #tpu.memory_space<smem>>
    %358 = vector.broadcast %357 : f32 to vector<8x256xf32>
    %359 = arith.mulf %358, %348 : vector<8x256xf32>
    %360 = arith.addf %344, %359 : vector<8x256xf32>
    %c2_87 = arith.constant 2 : index
    %c0_88 = arith.constant 0 : index
    %c128_89 = arith.constant 128 : index
    %361 = vector.load %arg5[%c2_87, %c0_88, %c128_89] : memref<3x8x512xf32, #tpu.memory_space<vmem>>, vector<1x8x256xf32>
    %362 = vector.shape_cast %361 : vector<1x8x256xf32> to vector<8x256xf32>
    %c22 = arith.constant 22 : index
    %363 = memref.load %arg2[%c22] : memref<81xf32, #tpu.memory_space<smem>>
    %364 = vector.broadcast %363 : f32 to vector<8x256xf32>
    %365 = arith.mulf %364, %362 : vector<8x256xf32>
    %366 = arith.addf %352, %365 : vector<8x256xf32>
    %c49 = arith.constant 49 : index
    %367 = memref.load %arg2[%c49] : memref<81xf32, #tpu.memory_space<smem>>
    %368 = vector.broadcast %367 : f32 to vector<8x256xf32>
    %369 = arith.mulf %368, %362 : vector<8x256xf32>
    %370 = arith.addf %356, %369 : vector<8x256xf32>
    %c76 = arith.constant 76 : index
    %371 = memref.load %arg2[%c76] : memref<81xf32, #tpu.memory_space<smem>>
    %372 = vector.broadcast %371 : f32 to vector<8x256xf32>
    %373 = arith.mulf %372, %362 : vector<8x256xf32>
    %374 = arith.addf %360, %373 : vector<8x256xf32>
    %c2_90 = arith.constant 2 : index
    %c0_91 = arith.constant 0 : index
    %c129_92 = arith.constant 129 : index
    %375 = vector.load %arg5[%c2_90, %c0_91, %c129_92] : memref<3x8x512xf32, #tpu.memory_space<vmem>>, vector<1x8x256xf32>
    %376 = vector.shape_cast %375 : vector<1x8x256xf32> to vector<8x256xf32>
    %cst_93 = arith.constant 0.000000e+00 : f32
    %377 = vector.broadcast %cst_93 : f32 to vector<8x256xf32>
    %378 = arith.select %25, %376, %377 : vector<8x256xi1>, vector<8x256xf32>
    %c23 = arith.constant 23 : index
    %379 = memref.load %arg2[%c23] : memref<81xf32, #tpu.memory_space<smem>>
    %380 = vector.broadcast %379 : f32 to vector<8x256xf32>
    %381 = arith.mulf %380, %378 : vector<8x256xf32>
    %382 = arith.addf %366, %381 : vector<8x256xf32>
    %c50 = arith.constant 50 : index
    %383 = memref.load %arg2[%c50] : memref<81xf32, #tpu.memory_space<smem>>
    %384 = vector.broadcast %383 : f32 to vector<8x256xf32>
    %385 = arith.mulf %384, %378 : vector<8x256xf32>
    %386 = arith.addf %370, %385 : vector<8x256xf32>
    %c77 = arith.constant 77 : index
    %387 = memref.load %arg2[%c77] : memref<81xf32, #tpu.memory_space<smem>>
    %388 = vector.broadcast %387 : f32 to vector<8x256xf32>
    %389 = arith.mulf %388, %378 : vector<8x256xf32>
    %390 = arith.addf %374, %389 : vector<8x256xf32>
    %c2_94 = arith.constant 2 : index
    %c0_95 = arith.constant 0 : index
    %c143_96 = arith.constant 143 : index
    %391 = vector.load %arg5[%c2_94, %c0_95, %c143_96] : memref<3x8x512xf32, #tpu.memory_space<vmem>>, vector<1x8x256xf32>
    %392 = vector.shape_cast %391 : vector<1x8x256xf32> to vector<8x256xf32>
    %cst_97 = arith.constant 0.000000e+00 : f32
    %393 = vector.broadcast %cst_97 : f32 to vector<8x256xf32>
    %394 = arith.select %23, %392, %393 : vector<8x256xi1>, vector<8x256xf32>
    %c24 = arith.constant 24 : index
    %395 = memref.load %arg2[%c24] : memref<81xf32, #tpu.memory_space<smem>>
    %396 = vector.broadcast %395 : f32 to vector<8x256xf32>
    %397 = arith.mulf %396, %394 : vector<8x256xf32>
    %398 = arith.addf %382, %397 : vector<8x256xf32>
    %c51 = arith.constant 51 : index
    %399 = memref.load %arg2[%c51] : memref<81xf32, #tpu.memory_space<smem>>
    %400 = vector.broadcast %399 : f32 to vector<8x256xf32>
    %401 = arith.mulf %400, %394 : vector<8x256xf32>
    %402 = arith.addf %386, %401 : vector<8x256xf32>
    %c78 = arith.constant 78 : index
    %403 = memref.load %arg2[%c78] : memref<81xf32, #tpu.memory_space<smem>>
    %404 = vector.broadcast %403 : f32 to vector<8x256xf32>
    %405 = arith.mulf %404, %394 : vector<8x256xf32>
    %406 = arith.addf %390, %405 : vector<8x256xf32>
    %c2_98 = arith.constant 2 : index
    %c0_99 = arith.constant 0 : index
    %c144_100 = arith.constant 144 : index
    %407 = vector.load %arg5[%c2_98, %c0_99, %c144_100] : memref<3x8x512xf32, #tpu.memory_space<vmem>>, vector<1x8x256xf32>
    %408 = vector.shape_cast %407 : vector<1x8x256xf32> to vector<8x256xf32>
    %c25 = arith.constant 25 : index
    %409 = memref.load %arg2[%c25] : memref<81xf32, #tpu.memory_space<smem>>
    %410 = vector.broadcast %409 : f32 to vector<8x256xf32>
    %411 = arith.mulf %410, %408 : vector<8x256xf32>
    %412 = arith.addf %398, %411 : vector<8x256xf32>
    %c52 = arith.constant 52 : index
    %413 = memref.load %arg2[%c52] : memref<81xf32, #tpu.memory_space<smem>>
    %414 = vector.broadcast %413 : f32 to vector<8x256xf32>
    %415 = arith.mulf %414, %408 : vector<8x256xf32>
    %416 = arith.addf %402, %415 : vector<8x256xf32>
    %c79 = arith.constant 79 : index
    %417 = memref.load %arg2[%c79] : memref<81xf32, #tpu.memory_space<smem>>
    %418 = vector.broadcast %417 : f32 to vector<8x256xf32>
    %419 = arith.mulf %418, %408 : vector<8x256xf32>
    %420 = arith.addf %406, %419 : vector<8x256xf32>
    %c2_101 = arith.constant 2 : index
    %c0_102 = arith.constant 0 : index
    %c145_103 = arith.constant 145 : index
    %421 = vector.load %arg5[%c2_101, %c0_102, %c145_103] : memref<3x8x512xf32, #tpu.memory_space<vmem>>, vector<1x8x256xf32>
    %422 = vector.shape_cast %421 : vector<1x8x256xf32> to vector<8x256xf32>
    %cst_104 = arith.constant 0.000000e+00 : f32
    %423 = vector.broadcast %cst_104 : f32 to vector<8x256xf32>
    %424 = arith.select %25, %422, %423 : vector<8x256xi1>, vector<8x256xf32>
    %c26 = arith.constant 26 : index
    %425 = memref.load %arg2[%c26] : memref<81xf32, #tpu.memory_space<smem>>
    %426 = vector.broadcast %425 : f32 to vector<8x256xf32>
    %427 = arith.mulf %426, %424 : vector<8x256xf32>
    %428 = arith.addf %412, %427 : vector<8x256xf32>
    %c53 = arith.constant 53 : index
    %429 = memref.load %arg2[%c53] : memref<81xf32, #tpu.memory_space<smem>>
    %430 = vector.broadcast %429 : f32 to vector<8x256xf32>
    %431 = arith.mulf %430, %424 : vector<8x256xf32>
    %432 = arith.addf %416, %431 : vector<8x256xf32>
    %c80 = arith.constant 80 : index
    %433 = memref.load %arg2[%c80] : memref<81xf32, #tpu.memory_space<smem>>
    %434 = vector.broadcast %433 : f32 to vector<8x256xf32>
    %435 = arith.mulf %434, %424 : vector<8x256xf32>
    %436 = arith.addf %420, %435 : vector<8x256xf32>
    %c0_105 = arith.constant 0 : index
    %c0_106 = arith.constant 0 : index
    %c0_107 = arith.constant 0 : index
    %437 = vector.load %arg1[%c0_105, %c0_106, %c0_107] : memref<3x8x256xf32, #tpu.memory_space<vmem>>, vector<1x8x256xf32>
    %438 = vector.shape_cast %437 : vector<1x8x256xf32> to vector<8x256xf32>
    %c0_108 = arith.constant 0 : index
    %439 = memref.load %arg3[%c0_108] : memref<3xf32, #tpu.memory_space<smem>>
    %440 = vector.broadcast %439 : f32 to vector<8x256xf32>
    %441 = arith.addf %428, %440 : vector<8x256xf32>
    %cst_109 = arith.constant 0.000000e+00 : f32
    %442 = vector.broadcast %cst_109 : f32 to vector<8x256xf32>
    %443 = arith.maximumf %441, %442 : vector<8x256xf32>
    %444 = arith.addf %443, %438 : vector<8x256xf32>
    %c0_110 = arith.constant 0 : index
    %c0_111 = arith.constant 0 : index
    %c0_112 = arith.constant 0 : index
    %445 = vector.load %arg4[%c0_110, %c0_111, %c0_112] : memref<3x8x256xf32, #tpu.memory_space<vmem>>, vector<1x8x256xf32>
    %446 = vector.shape_cast %445 : vector<1x8x256xf32> to vector<8x256xf32>
    %447 = vector.shape_cast %444 : vector<8x256xf32> to vector<1x8x256xf32>
    tpu.vector_store %arg4[%c0_110, %c0_111, %c0_112], %447 {strides = array<i32>} : memref<3x8x256xf32, #tpu.memory_space<vmem>>, vector<1x8x256xf32>,
    %c1_113 = arith.constant 1 : index
    %c0_114 = arith.constant 0 : index
    %c0_115 = arith.constant 0 : index
    %448 = vector.load %arg1[%c1_113, %c0_114, %c0_115] : memref<3x8x256xf32, #tpu.memory_space<vmem>>, vector<1x8x256xf32>
    %449 = vector.shape_cast %448 : vector<1x8x256xf32> to vector<8x256xf32>
    %c1_116 = arith.constant 1 : index
    %450 = memref.load %arg3[%c1_116] : memref<3xf32, #tpu.memory_space<smem>>
    %451 = vector.broadcast %450 : f32 to vector<8x256xf32>
    %452 = arith.addf %432, %451 : vector<8x256xf32>
    %cst_117 = arith.constant 0.000000e+00 : f32
    %453 = vector.broadcast %cst_117 : f32 to vector<8x256xf32>
    %454 = arith.maximumf %452, %453 : vector<8x256xf32>
    %455 = arith.addf %454, %449 : vector<8x256xf32>
    %c1_118 = arith.constant 1 : index
    %c0_119 = arith.constant 0 : index
    %c0_120 = arith.constant 0 : index
    %456 = vector.load %arg4[%c1_118, %c0_119, %c0_120] : memref<3x8x256xf32, #tpu.memory_space<vmem>>, vector<1x8x256xf32>
    %457 = vector.shape_cast %456 : vector<1x8x256xf32> to vector<8x256xf32>
    %458 = vector.shape_cast %455 : vector<8x256xf32> to vector<1x8x256xf32>
    tpu.vector_store %arg4[%c1_118, %c0_119, %c0_120], %458 {strides = array<i32>} : memref<3x8x256xf32, #tpu.memory_space<vmem>>, vector<1x8x256xf32>,
    %c2_121 = arith.constant 2 : index
    %c0_122 = arith.constant 0 : index
    %c0_123 = arith.constant 0 : index
    %459 = vector.load %arg1[%c2_121, %c0_122, %c0_123] : memref<3x8x256xf32, #tpu.memory_space<vmem>>, vector<1x8x256xf32>
    %460 = vector.shape_cast %459 : vector<1x8x256xf32> to vector<8x256xf32>
    %c2_124 = arith.constant 2 : index
    %461 = memref.load %arg3[%c2_124] : memref<3xf32, #tpu.memory_space<smem>>
    %462 = vector.broadcast %461 : f32 to vector<8x256xf32>
    %463 = arith.addf %436, %462 : vector<8x256xf32>
    %cst_125 = arith.constant 0.000000e+00 : f32
    %464 = vector.broadcast %cst_125 : f32 to vector<8x256xf32>
    %465 = arith.maximumf %463, %464 : vector<8x256xf32>
    %466 = arith.addf %465, %460 : vector<8x256xf32>
    %c2_126 = arith.constant 2 : index
    %c0_127 = arith.constant 0 : index
    %c0_128 = arith.constant 0 : index
    %467 = vector.load %arg4[%c2_126, %c0_127, %c0_128] : memref<3x8x256xf32, #tpu.memory_space<vmem>>, vector<1x8x256xf32>
    %468 = vector.shape_cast %467 : vector<1x8x256xf32> to vector<8x256xf32>
    %469 = vector.shape_cast %466 : vector<8x256xf32> to vector<1x8x256xf32>
    tpu.vector_store %arg4[%c2_126, %c0_127, %c0_128], %469 {strides = array<i32>} : memref<3x8x256xf32, #tpu.memory_space<vmem>>, vector<1x8x256xf32>,
    return
  }
  func.func @transform_0(%arg0: i32) -> (i32, i32, i32) {
    %c0_i32 = arith.constant 0 : i32
    %c0_i32_0 = arith.constant 0 : i32
    %c0_i32_1 = arith.constant 0 : i32
    return %c0_i32, %arg0, %c0_i32_0 : i32, i32, i32
  }
  func.func @transform_1(%arg0: i32) -> i32 {
    %c0_i32 = arith.constant 0 : i32
    %c0_i32_0 = arith.constant 0 : i32
    return %c0_i32 : i32
  }
  func.func @transform_2(%arg0: i32) -> i32 {
    %c0_i32 = arith.constant 0 : i32
    %c0_i32_0 = arith.constant 0 : i32
    return %c0_i32 : i32
  }
  func.func @transform_3(%arg0: i32) -> (i32, i32, i32) {
    %c0_i32 = arith.constant 0 : i32
    %c0_i32_0 = arith.constant 0 : i32
    %c0_i32_1 = arith.constant 0 : i32
    return %c0_i32, %arg0, %c0_i32_0 : i32, i32, i32
  }
}

</mosaic_0001>

<llo_original>
// kernel: tpu_custom_call.1
$region0: #{tpu_custom_call.1}
  #allocation0 [shape = 'u32[]', space=smem, size = 0x4, offset = 0x4, fixed_abs, tag = 'smem constant byte address 0x4 - core index']
  #allocation1 [shape = 'u32[72,128]{1,0:T(1,128)}', space=vmem, size = 0x9000, scoped, tag = 'internal scratch']
  #allocation2 [shape = 'f32[3,8,512]{2,1,0:T(8,128)}', space=vmem, size = 0xc000, scoped, tag = 'scratch operand']
  %s0 = inlined_call_operand.hbm [shape: f32[3,8,256], index: 0, kind: input, shape index: {}]
  %s1 = inlined_call_operand.hbm [shape: f32[81], index: 1, kind: input, shape index: {}]
  %s2 = inlined_call_operand.vmem [shape: f32[3], index: 2, kind: input, shape index: {}]
  %s3 = inlined_call_operand.hbm [shape: f32[3,8,256], index: 3, kind: output, shape index: {}]
  %s4 = sld [smem:[#allocation0]]
  $region34: #{tpu_custom_call.1} parent=0
    _
  %s6 = ssub.s32 1, %s4
  %s7 = scalar_select 0, %s6, %s4
  $region1: #{tpu_custom_call.1} parent=0
    #allocation3 [shape = 'u8[24576]{0}', space=vmem, size = 0x6000, scoped, tag = 'input window, operand 0, single buffered']
    #allocation4 [shape = 's32[1]{0}', space=sflag, size = 0x4, scoped, tag = 'scoped memory for tpu_custom_call.1']
    #allocation5 [shape = 's32[1]{0}', space=sflag, size = 0x4, scoped, tag = 'scoped memory for tpu_custom_call.1']
    #allocation6 [shape = 's32[1]{0}', space=sflag, size = 0x4, scoped, tag = 'scoped memory for tpu_custom_call.1']
    #allocation7 [shape = 's32[1]{0}', space=sflag, size = 0x4, scoped, tag = 'scoped memory for tpu_custom_call.1']
    #allocation8 [shape = 'u8[512]{0}', space=smem, size = 0x200, scoped, tag = 'input window, operand 1, single buffered']
    #allocation9 [shape = 'u8[512]{0}', space=smem, size = 0x200, scoped, tag = 'input window, operand 2, single buffered']
    #allocation10 [shape = 'u8[24576]{0}', space=vmem, size = 0x6000, scoped, tag = 'output window, operand 0, single buffered']
    %8 = vsyncpa [#allocation4], 0
    %9 = vsyncpa [#allocation6], 0
    %10 = vsyncpa [#allocation7], 0
    %11 = vsyncpa [#allocation5], 0
    // Predicated region
    $region2: #{tpu_custom_call.1} parent=1 // pred_check
      _
    $region3: #{tpu_custom_call.1} parent=1 // pred_check_branch
      %13 = sbr.rel (0) target = $region5
    $region4: #{tpu_custom_call.1} parent=1 // pred_region
      %15 = vsyncadd [#allocation4], 0
      %s16 = sshll.u32 %s0, 4
      %s17 = int_to_ptr.hbm [resolvable:$true] %s16
      %s18 = sshll.u32 [#allocation3], 4
      %s19 = int_to_ptr.vmem [resolvable:$true] %s18
      %24 = dma.hbm_to_vmem [thread:$0]  %s17, 768, %s19, [#allocation4], 256, 256, 16
    $region5: #{tpu_custom_call.1} parent=1 // pred_fallthru
      _
    // Predicated region
    $region6: #{tpu_custom_call.1} parent=1 // pred_check
      _
    $region7: #{tpu_custom_call.1} parent=1 // pred_check_branch
      %26 = sbr.rel (0) target = $region9
    $region8: #{tpu_custom_call.1} parent=1 // pred_region
      %28 = vsyncadd [#allocation6], 0
      %s30 = sshll.u32 %s1, 4
      %s31 = int_to_ptr.hbm [resolvable:$true] %s30
      %33 = dma.hbm_to_smem %s31, 16, [#allocation8], [#allocation6]
    $region9: #{tpu_custom_call.1} parent=1 // pred_fallthru
      _
    // Predicated region
    $region10: #{tpu_custom_call.1} parent=1 // pred_check
      _
    $region11: #{tpu_custom_call.1} parent=1 // pred_check_branch
      %35 = sbr.rel (0) target = $region13
    $region12: #{tpu_custom_call.1} parent=1 // pred_region
      %37 = vsyncadd [#allocation7], 0
      %s39 = sshll.u32 %s2, 4
      %s40 = int_to_ptr.vmem [resolvable:$true] %s39
      %42 = dma.vmem_to_smem %s40, 16, [#allocation9], [#allocation7]
    $region13: #{tpu_custom_call.1} parent=1 // pred_fallthru
      _
    // Predicated region
    $region14: #{tpu_custom_call.1} parent=1 // pred_check
      _
    $region15: #{tpu_custom_call.1} parent=1 // pred_check_branch
      %44 = sbr.rel (0) target = $region17
    $region16: #{tpu_custom_call.1} parent=1 // pred_region
      %46 = dma.done [#allocation4], 768
    $region17: #{tpu_custom_call.1} parent=1 // pred_fallthru
      _
    // Predicated region
    $region18: #{tpu_custom_call.1} parent=1 // pred_check
      _
    $region19: #{tpu_custom_call.1} parent=1 // pred_check_branch
      %48 = sbr.rel (0) target = $region21
    $region20: #{tpu_custom_call.1} parent=1 // pred_region
      %50 = dma.done [#allocation6], 16
    $region21: #{tpu_custom_call.1} parent=1 // pred_fallthru
      _
    // Predicated region
    $region22: #{tpu_custom_call.1} parent=1 // pred_check
      _
    $region23: #{tpu_custom_call.1} parent=1 // pred_check_branch
      %52 = sbr.rel (0) target = $region25
    $region24: #{tpu_custom_call.1} parent=1 // pred_region
      %54 = dma.done [#allocation7], 16
    $region25: #{tpu_custom_call.1} parent=1 // pred_fallthru
      _
    %55 = sfence
    %56 = vst [vmem:[#allocation2] sm:$0xff] 0.0
    %57 = vst [vmem:[#allocation2 + $0x20] sm:$0xff] 0.0
    %58 = vst [vmem:[#allocation2 + $0x40] sm:$0xff] 0.0
    %59 = vst [vmem:[#allocation2 + $0x18] sm:$0xff] 0.0
    %60 = vst [vmem:[#allocation2 + $0x38] sm:$0xff] 0.0
    %61 = vst [vmem:[#allocation2 + $0x58] sm:$0xff] 0.0
    %v62 = vld [vmem:[#allocation3] sm:$0xff]
    %v63 = vld [vmem:[#allocation3 + $0x8] sm:$0xff]
    %v64 = vld [vmem:[#allocation3 + $0x10] sm:$0xff]
    %v65 = vld [vmem:[#allocation3 + $0x18] sm:$0xff]
    %v66 = vld [vmem:[#allocation3 + $0x20] sm:$0xff]
    %v67 = vld [vmem:[#allocation3 + $0x28] sm:$0xff]
    %68 = vst [vmem:[#allocation2 + $0x8] sm:$0xff] %v62
    %69 = vst [vmem:[#allocation2 + $0x10] sm:$0xff] %v63
    %70 = vst [vmem:[#allocation2 + $0x28] sm:$0xff] %v64
    %71 = vst [vmem:[#allocation2 + $0x30] sm:$0xff] %v65
    %72 = vst [vmem:[#allocation2 + $0x48] sm:$0xff] %v66
    %73 = vst [vmem:[#allocation2 + $0x50] sm:$0xff] %v67
    %v74 = vlaneseq
    %v75 = vand.u32 %v74, 127
    %v76 = vadd.s32 %v75, 128
    %vm77 = vcmp.lt.s32.totalorder %v75, 0
    %v78 = vsub.s32 0, %v75
    %v79 = vsel %vm77, %v78, %v75
    %v80 = vshrl.u32 %v79, 4
    %v81 = vand.u32 %v79, 15
    %v82 = vsub.s32 0, %v81
    %v83 = vsel %vm77, %v82, %v81
    %vm84 = vcmp.lt.s32.totalorder %v76, 0
    %v85 = vsub.s32 0, %v76
    %v86 = vsel %vm84, %v85, %v76
    %v87 = vshrl.u32 %v86, 4
    %v88 = vand.u32 %v86, 15
    %v89 = vsub.s32 0, %v88
    %v90 = vsel %vm84, %v89, %v88
    %vm91 = vcmp.ne.s32.totalorder %v83, 0
    %vm92 = vcmp.ne.s32.totalorder %v90, 0
    %vm93 = vcmp.lt.s32.totalorder %v83, 0
    %vm94 = vcmp.lt.s32.totalorder %v90, 0
    %vm95 = vmand %vm93, %vm91
    %vm96 = vmand %vm94, %vm92
    %v97 = vadd.s32 %v83, 16
    %v98 = vadd.s32 %v90, 16
    %v99 = vsel %vm95, %v97, %v83
    %v100 = vsel %vm96, %v98, %v90
    %vm101 = vcmp.ne.s32.totalorder %v99, 0
    %vm102 = vcmp.ne.s32.totalorder %v100, 0
    %vm103 = vcmp.ne.s32.totalorder %v99, 15
    %vm104 = vcmp.ne.s32.totalorder %v100, 15
    %v105 = vld [vmem:[#allocation2] sm:$0xff]
    %v106 = vld [vmem:[#allocation2 + $0x8] sm:$0xff]
    %v107 = vld [vmem:[#allocation2 + $0x10] sm:$0xff]
    %111 = vrot.lane.b32.xlu0 %v105, 17
    %v112 = vpop.permute.xlu0 %111
    %113 = vrot.lane.b32.xlu0 %v106, 17
    %v114 = vpop.permute.xlu0 %113
    %115 = vrot.lane.b32.xlu0 %v107, 17
    %v116 = vpop.permute.xlu0 %115
    %vm117 = vcmask 138240
    %v118 = vsel %vm117, %v112, %v114
    %v119 = vsel %vm117, %v114, %v116
    %v122 = vsel %vm101, %v118, 0.0
    %v123 = vsel %vm102, %v119, 0.0
    %s124 = sld [smem:[#allocation8]]
    %v125 = vstv %s124
    %v126 = vmul.f32 %v125, %v122
    %v127 = vmul.f32 %v125, %v123
    %s128 = sld [smem:[#allocation8 + $0x1b]]
    %v129 = vstv %s128
    %v130 = vmul.f32 %v129, %v122
    %v131 = vmul.f32 %v129, %v123
    %s132 = sld [smem:[#allocation8 + $0x36]]
    %v133 = vstv %s132
    %v134 = vmul.f32 %v133, %v122
    %v135 = vmul.f32 %v133, %v123
    %s136 = sld [smem:[#allocation8 + $0x1]]
    %v137 = vstv %s136
    %v138 = vmul.f32 %v137, %v105
    %v139 = vmul.f32 %v137, %v106
    %v140 = vmul.f32 %v137, %v107
    %144 = vrot.lane.b32.xlu0 %v138, 16
    %v145 = vpop.permute.xlu0 %144
    %146 = vrot.lane.b32.xlu0 %v139, 16
    %v147 = vpop.permute.xlu0 %146
    %148 = vrot.lane.b32.xlu0 %v140, 16
    %v149 = vpop.permute.xlu0 %148
    %vm150 = vcmask 130048
    %v151 = vsel %vm150, %v145, %v147
    %v152 = vsel %vm150, %v147, %v149
    %v155 = vadd.f32 %v126, %v151
    %v156 = vadd.f32 %v127, %v152
    %s157 = sld [smem:[#allocation8 + $0x1c]]
    %v158 = vstv %s157
    %v159 = vmul.f32 %v158, %v105
    %v160 = vmul.f32 %v158, %v106
    %v161 = vmul.f32 %v158, %v107
    %165 = vrot.lane.b32.xlu0 %v159, 16
    %v166 = vpop.permute.xlu0 %165
    %167 = vrot.lane.b32.xlu0 %v160, 16
    %v168 = vpop.permute.xlu0 %167
    %169 = vrot.lane.b32.xlu0 %v161, 16
    %v170 = vpop.permute.xlu0 %169
    %v171 = vsel %vm150, %v166, %v168
    %v172 = vsel %vm150, %v168, %v170
    %v175 = vadd.f32 %v130, %v171
    %v176 = vadd.f32 %v131, %v172
    %s177 = sld [smem:[#allocation8 + $0x37]]
    %v178 = vstv %s177
    %v179 = vmul.f32 %v178, %v105
    %v180 = vmul.f32 %v178, %v106
    %v181 = vmul.f32 %v178, %v107
    %185 = vrot.lane.b32.xlu0 %v179, 16
    %v186 = vpop.permute.xlu0 %185
    %187 = vrot.lane.b32.xlu0 %v180, 16
    %v188 = vpop.permute.xlu0 %187
    %189 = vrot.lane.b32.xlu0 %v181, 16
    %v190 = vpop.permute.xlu0 %189
    %v191 = vsel %vm150, %v186, %v188
    %v192 = vsel %vm150, %v188, %v190
    %v195 = vadd.f32 %v134, %v191
    %v196 = vadd.f32 %v135, %v192
    %197 = vrot.lane.b32.xlu0 %v105, 15
    %v198 = vpop.permute.xlu0 %197
    %199 = vrot.lane.b32.xlu0 %v106, 15
    %v200 = vpop.permute.xlu0 %199
    %201 = vrot.lane.b32.xlu0 %v107, 15
    %v202 = vpop.permute.xlu0 %201
    %vm203 = vcmask 121856
    %v204 = vsel %vm203, %v198, %v200
    %v205 = vsel %vm203, %v200, %v202
    %v208 = vsel %vm103, %v204, 0.0
    %v209 = vsel %vm104, %v205, 0.0
    %s210 = sld [smem:[#allocation8 + $0x2]]
    %v211 = vstv %s210
    %v212 = vmul.f32 %v211, %v208
    %v213 = vmul.f32 %v211, %v209
    %v214 = vadd.f32 %v155, %v212
    %v215 = vadd.f32 %v156, %v213
    %s216 = sld [smem:[#allocation8 + $0x1d]]
    %v217 = vstv %s216
    %v218 = vmul.f32 %v217, %v208
    %v219 = vmul.f32 %v217, %v209
    %v220 = vadd.f32 %v175, %v218
    %v221 = vadd.f32 %v176, %v219
    %s222 = sld [smem:[#allocation8 + $0x38]]
    %v223 = vstv %s222
    %v224 = vmul.f32 %v223, %v208
    %v225 = vmul.f32 %v223, %v209
    %v226 = vadd.f32 %v195, %v224
    %v227 = vadd.f32 %v196, %v225
    %228 = vrot.lane.b32.xlu0 %v105, 1
    %v229 = vpop.permute.xlu0 %228
    %230 = vrot.lane.b32.xlu0 %v106, 1
    %v231 = vpop.permute.xlu0 %230
    %232 = vrot.lane.b32.xlu0 %v107, 1
    %v233 = vpop.permute.xlu0 %232
    %vm234 = vcmask 7168
    %v235 = vsel %vm234, %v229, %v231
    %v236 = vsel %vm234, %v231, %v233
    %v239 = vsel %vm101, %v235, 0.0
    %v240 = vsel %vm102, %v236, 0.0
    %s241 = sld [smem:[#allocation8 + $0x3]]
    %v242 = vstv %s241
    %v243 = vmul.f32 %v242, %v239
    %v244 = vmul.f32 %v242, %v240
    %v245 = vadd.f32 %v214, %v243
    %v246 = vadd.f32 %v215, %v244
    %s247 = sld [smem:[#allocation8 + $0x1e]]
    %v248 = vstv %s247
    %v249 = vmul.f32 %v248, %v239
    %v250 = vmul.f32 %v248, %v240
    %v251 = vadd.f32 %v220, %v249
    %v252 = vadd.f32 %v221, %v250
    %s253 = sld [smem:[#allocation8 + $0x39]]
    %v254 = vstv %s253
    %v255 = vmul.f32 %v254, %v239
    %v256 = vmul.f32 %v254, %v240
    %v257 = vadd.f32 %v226, %v255
    %v258 = vadd.f32 %v227, %v256
    %s259 = sld [smem:[#allocation8 + $0x4]]
    %v260 = vstv %s259
    %v261 = vmul.f32 %v260, %v106
    %v262 = vmul.f32 %v260, %v107
    %v263 = vadd.f32 %v245, %v261
    %v264 = vadd.f32 %v246, %v262
    %s265 = sld [smem:[#allocation8 + $0x1f]]
    %v266 = vstv %s265
    %v267 = vmul.f32 %v266, %v106
    %v268 = vmul.f32 %v266, %v107
    %v269 = vadd.f32 %v251, %v267
    %v270 = vadd.f32 %v252, %v268
    %s271 = sld [smem:[#allocation8 + $0x3a]]
    %v272 = vstv %s271
    %v273 = vmul.f32 %v272, %v106
    %v274 = vmul.f32 %v272, %v107
    %v275 = vadd.f32 %v257, %v273
    %v276 = vadd.f32 %v258, %v274
    %v277 = vld [vmem:[#allocation2 + $0x8] sm:$0xff]
    %v278 = vld [vmem:[#allocation2 + $0x10] sm:$0xff]
    %v279 = vld [vmem:[#allocation2 + $0x18] sm:$0xff]
    %283 = vrot.lane.b32.xlu0 %v277, 127
    %v284 = vpop.permute.xlu0 %283
    %285 = vrot.lane.b32.xlu0 %v278, 127
    %v286 = vpop.permute.xlu0 %285
    %287 = vrot.lane.b32.xlu0 %v279, 127
    %v288 = vpop.permute.xlu0 %287
    %vm289 = vcmask 1039360
    %v290 = vsel %vm289, %v284, %v286
    %v291 = vsel %vm289, %v286, %v288
    %v294 = vsel %vm103, %v290, 0.0
    %v295 = vsel %vm104, %v291, 0.0
    %s296 = sld [smem:[#allocation8 + $0x5]]
    %v297 = vstv %s296
    %v298 = vmul.f32 %v297, %v294
    %v299 = vmul.f32 %v297, %v295
    %v300 = vadd.f32 %v263, %v298
    %v301 = vadd.f32 %v264, %v299
    %s302 = sld [smem:[#allocation8 + $0x20]]
    %v303 = vstv %s302
    %v304 = vmul.f32 %v303, %v294
    %v305 = vmul.f32 %v303, %v295
    %v306 = vadd.f32 %v269, %v304
    %v307 = vadd.f32 %v270, %v305
    %s308 = sld [smem:[#allocation8 + $0x3b]]
    %v309 = vstv %s308
    %v310 = vmul.f32 %v309, %v294
    %v311 = vmul.f32 %v309, %v295
    %v312 = vadd.f32 %v275, %v310
    %v313 = vadd.f32 %v276, %v311
    %314 = vrot.lane.b32.xlu0 %v277, 113
    %v315 = vpop.permute.xlu0 %314
    %316 = vrot.lane.b32.xlu0 %v278, 113
    %v317 = vpop.permute.xlu0 %316
    %318 = vrot.lane.b32.xlu0 %v279, 113
    %v319 = vpop.permute.xlu0 %318
    %vm320 = vcmask 924672
    %v321 = vsel %vm320, %v315, %v317
    %v322 = vsel %vm320, %v317, %v319
    %v325 = vsel %vm101, %v321, 0.0
    %v326 = vsel %vm102, %v322, 0.0
    %s327 = sld [smem:[#allocation8 + $0x6]]
    %v328 = vstv %s327
    %v329 = vmul.f32 %v328, %v325
    %v330 = vmul.f32 %v328, %v326
    %v331 = vadd.f32 %v300, %v329
    %v332 = vadd.f32 %v301, %v330
    %s333 = sld [smem:[#allocation8 + $0x21]]
    %v334 = vstv %s333
    %v335 = vmul.f32 %v334, %v325
    %v336 = vmul.f32 %v334, %v326
    %v337 = vadd.f32 %v306, %v335
    %v338 = vadd.f32 %v307, %v336
    %s339 = sld [smem:[#allocation8 + $0x3c]]
    %v340 = vstv %s339
    %v341 = vmul.f32 %v340, %v325
    %v342 = vmul.f32 %v340, %v326
    %v343 = vadd.f32 %v312, %v341
    %v344 = vadd.f32 %v313, %v342
    %s345 = sld [smem:[#allocation8 + $0x7]]
    %v346 = vstv %s345
    %v347 = vmul.f32 %v346, %v277
    %v348 = vmul.f32 %v346, %v278
    %v349 = vmul.f32 %v346, %v279
    %353 = vrot.lane.b32.xlu0 %v347, 112
    %v354 = vpop.permute.xlu0 %353
    %355 = vrot.lane.b32.xlu0 %v348, 112
    %v356 = vpop.permute.xlu0 %355
    %357 = vrot.lane.b32.xlu0 %v349, 112
    %v358 = vpop.permute.xlu0 %357
    %vm359 = vcmask 916480
    %v360 = vsel %vm359, %v354, %v356
    %v361 = vsel %vm359, %v356, %v358
    %v364 = vadd.f32 %v331, %v360
    %v365 = vadd.f32 %v332, %v361
    %s366 = sld [smem:[#allocation8 + $0x22]]
    %v367 = vstv %s366
    %v368 = vmul.f32 %v367, %v277
    %v369 = vmul.f32 %v367, %v278
    %v370 = vmul.f32 %v367, %v279
    %374 = vrot.lane.b32.xlu0 %v368, 112
    %v375 = vpop.permute.xlu0 %374
    %376 = vrot.lane.b32.xlu0 %v369, 112
    %v377 = vpop.permute.xlu0 %376
    %378 = vrot.lane.b32.xlu0 %v370, 112
    %v379 = vpop.permute.xlu0 %378
    %v380 = vsel %vm359, %v375, %v377
    %v381 = vsel %vm359, %v377, %v379
    %v384 = vadd.f32 %v337, %v380
    %v385 = vadd.f32 %v338, %v381
    %s386 = sld [smem:[#allocation8 + $0x3d]]
    %v387 = vstv %s386
    %v388 = vmul.f32 %v387, %v277
    %v389 = vmul.f32 %v387, %v278
    %v390 = vmul.f32 %v387, %v279
    %394 = vrot.lane.b32.xlu0 %v388, 112
    %v395 = vpop.permute.xlu0 %394
    %396 = vrot.lane.b32.xlu0 %v389, 112
    %v397 = vpop.permute.xlu0 %396
    %398 = vrot.lane.b32.xlu0 %v390, 112
    %v399 = vpop.permute.xlu0 %398
    %v400 = vsel %vm359, %v395, %v397
    %v401 = vsel %vm359, %v397, %v399
    %v404 = vadd.f32 %v343, %v400
    %v405 = vadd.f32 %v344, %v401
    %406 = vrot.lane.b32.xlu0 %v277, 111
    %v407 = vpop.permute.xlu0 %406
    %408 = vrot.lane.b32.xlu0 %v278, 111
    %v409 = vpop.permute.xlu0 %408
    %410 = vrot.lane.b32.xlu0 %v279, 111
    %v411 = vpop.permute.xlu0 %410
    %vm412 = vcmask 908288
    %v413 = vsel %vm412, %v407, %v409
    %v414 = vsel %vm412, %v409, %v411
    %v417 = vsel %vm103, %v413, 0.0
    %v418 = vsel %vm104, %v414, 0.0
    %s419 = sld [smem:[#allocation8 + $0x8]]
    %v420 = vstv %s419
    %v421 = vmul.f32 %v420, %v417
    %v422 = vmul.f32 %v420, %v418
    %v423 = vadd.f32 %v364, %v421
    %v424 = vadd.f32 %v365, %v422
    %s425 = sld [smem:[#allocation8 + $0x23]]
    %v426 = vstv %s425
    %v427 = vmul.f32 %v426, %v417
    %v428 = vmul.f32 %v426, %v418
    %v429 = vadd.f32 %v384, %v427
    %v430 = vadd.f32 %v385, %v428
    %s431 = sld [smem:[#allocation8 + $0x3e]]
    %v432 = vstv %s431
    %v433 = vmul.f32 %v432, %v417
    %v434 = vmul.f32 %v432, %v418
    %v435 = vadd.f32 %v404, %v433
    %v436 = vadd.f32 %v405, %v434
    %s437 = scalar_lea.vmem [#allocation2], 32
    %v438 = vld [vmem:[%s437] sm:$0xff]
    %v439 = vld [vmem:[%s437 + $0x8] sm:$0xff]
    %v440 = vld [vmem:[%s437 + $0x10] sm:$0xff]
    %444 = vrot.lane.b32.xlu0 %v438, 17
    %v445 = vpop.permute.xlu0 %444
    %446 = vrot.lane.b32.xlu0 %v439, 17
    %v447 = vpop.permute.xlu0 %446
    %448 = vrot.lane.b32.xlu0 %v440, 17
    %v449 = vpop.permute.xlu0 %448
    %v450 = vsel %vm117, %v445, %v447
    %v451 = vsel %vm117, %v447, %v449
    %v454 = vsel %vm101, %v450, 0.0
    %v455 = vsel %vm102, %v451, 0.0
    %s456 = sld [smem:[#allocation8 + $0x9]]
    %v457 = vstv %s456
    %v458 = vmul.f32 %v457, %v454
    %v459 = vmul.f32 %v457, %v455
    %v460 = vadd.f32 %v423, %v458
    %v461 = vadd.f32 %v424, %v459
    %s462 = sld [smem:[#allocation8 + $0x24]]
    %v463 = vstv %s462
    %v464 = vmul.f32 %v463, %v454
    %v465 = vmul.f32 %v463, %v455
    %v466 = vadd.f32 %v429, %v464
    %v467 = vadd.f32 %v430, %v465
    %s468 = sld [smem:[#allocation8 + $0x3f]]
    %v469 = vstv %s468
    %v470 = vmul.f32 %v469, %v454
    %v471 = vmul.f32 %v469, %v455
    %v472 = vadd.f32 %v435, %v470
    %v473 = vadd.f32 %v436, %v471
    %s474 = sld [smem:[#allocation8 + $0xa]]
    %v475 = vstv %s474
    %v476 = vmul.f32 %v475, %v438
    %v477 = vmul.f32 %v475, %v439
    %v478 = vmul.f32 %v475, %v440
    %482 = vrot.lane.b32.xlu0 %v476, 16
    %v483 = vpop.permute.xlu0 %482
    %484 = vrot.lane.b32.xlu0 %v477, 16
    %v485 = vpop.permute.xlu0 %484
    %486 = vrot.lane.b32.xlu0 %v478, 16
    %v487 = vpop.permute.xlu0 %486
    %v488 = vsel %vm150, %v483, %v485
    %v489 = vsel %vm150, %v485, %v487
    %v492 = vadd.f32 %v460, %v488
    %v493 = vadd.f32 %v461, %v489
    %s494 = sld [smem:[#allocation8 + $0x25]]
    %v495 = vstv %s494
    %v496 = vmul.f32 %v495, %v438
    %v497 = vmul.f32 %v495, %v439
    %v498 = vmul.f32 %v495, %v440
    %502 = vrot.lane.b32.xlu0 %v496, 16
    %v503 = vpop.permute.xlu0 %502
    %504 = vrot.lane.b32.xlu0 %v497, 16
    %v505 = vpop.permute.xlu0 %504
    %506 = vrot.lane.b32.xlu0 %v498, 16
    %v507 = vpop.permute.xlu0 %506
    %v508 = vsel %vm150, %v503, %v505
    %v509 = vsel %vm150, %v505, %v507
    %v512 = vadd.f32 %v466, %v508
    %v513 = vadd.f32 %v467, %v509
    %s514 = sld [smem:[#allocation8 + $0x40]]
    %v515 = vstv %s514
    %v516 = vmul.f32 %v515, %v438
    %v517 = vmul.f32 %v515, %v439
    %v518 = vmul.f32 %v515, %v440
    %522 = vrot.lane.b32.xlu0 %v516, 16
    %v523 = vpop.permute.xlu0 %522
    %524 = vrot.lane.b32.xlu0 %v517, 16
    %v525 = vpop.permute.xlu0 %524
    %526 = vrot.lane.b32.xlu0 %v518, 16
    %v527 = vpop.permute.xlu0 %526
    %v528 = vsel %vm150, %v523, %v525
    %v529 = vsel %vm150, %v525, %v527
    %v532 = vadd.f32 %v472, %v528
    %v533 = vadd.f32 %v473, %v529
    %534 = vrot.lane.b32.xlu0 %v438, 15
    %v535 = vpop.permute.xlu0 %534
    %536 = vrot.lane.b32.xlu0 %v439, 15
    %v537 = vpop.permute.xlu0 %536
    %538 = vrot.lane.b32.xlu0 %v440, 15
    %v539 = vpop.permute.xlu0 %538
    %v540 = vsel %vm203, %v535, %v537
    %v541 = vsel %vm203, %v537, %v539
    %v544 = vsel %vm103, %v540, 0.0
    %v545 = vsel %vm104, %v541, 0.0
    %s546 = sld [smem:[#allocation8 + $0xb]]
    %v547 = vstv %s546
    %v548 = vmul.f32 %v547, %v544
    %v549 = vmul.f32 %v547, %v545
    %v550 = vadd.f32 %v492, %v548
    %v551 = vadd.f32 %v493, %v549
    %s552 = sld [smem:[#allocation8 + $0x26]]
    %v553 = vstv %s552
    %v554 = vmul.f32 %v553, %v544
    %v555 = vmul.f32 %v553, %v545
    %v556 = vadd.f32 %v512, %v554
    %v557 = vadd.f32 %v513, %v555
    %s558 = sld [smem:[#allocation8 + $0x41]]
    %v559 = vstv %s558
    %v560 = vmul.f32 %v559, %v544
    %v561 = vmul.f32 %v559, %v545
    %v562 = vadd.f32 %v532, %v560
    %v563 = vadd.f32 %v533, %v561
    %564 = vrot.lane.b32.xlu0 %v438, 1
    %v565 = vpop.permute.xlu0 %564
    %566 = vrot.lane.b32.xlu0 %v439, 1
    %v567 = vpop.permute.xlu0 %566
    %568 = vrot.lane.b32.xlu0 %v440, 1
    %v569 = vpop.permute.xlu0 %568
    %v570 = vsel %vm234, %v565, %v567
    %v571 = vsel %vm234, %v567, %v569
    %v574 = vsel %vm101, %v570, 0.0
    %v575 = vsel %vm102, %v571, 0.0
    %s576 = sld [smem:[#allocation8 + $0xc]]
    %v577 = vstv %s576
    %v578 = vmul.f32 %v577, %v574
    %v579 = vmul.f32 %v577, %v575
    %v580 = vadd.f32 %v550, %v578
    %v581 = vadd.f32 %v551, %v579
    %s582 = sld [smem:[#allocation8 + $0x27]]
    %v583 = vstv %s582
    %v584 = vmul.f32 %v583, %v574
    %v585 = vmul.f32 %v583, %v575
    %v586 = vadd.f32 %v556, %v584
    %v587 = vadd.f32 %v557, %v585
    %s588 = sld [smem:[#allocation8 + $0x42]]
    %v589 = vstv %s588
    %v590 = vmul.f32 %v589, %v574
    %v591 = vmul.f32 %v589, %v575
    %v592 = vadd.f32 %v562, %v590
    %v593 = vadd.f32 %v563, %v591
    %s594 = sld [smem:[#allocation8 + $0xd]]
    %v595 = vstv %s594
    %v596 = vmul.f32 %v595, %v439
    %v597 = vmul.f32 %v595, %v440
    %v598 = vadd.f32 %v580, %v596
    %v599 = vadd.f32 %v581, %v597
    %s600 = sld [smem:[#allocation8 + $0x28]]
    %v601 = vstv %s600
    %v602 = vmul.f32 %v601, %v439
    %v603 = vmul.f32 %v601, %v440
    %v604 = vadd.f32 %v586, %v602
    %v605 = vadd.f32 %v587, %v603
    %s606 = sld [smem:[#allocation8 + $0x43]]
    %v607 = vstv %s606
    %v608 = vmul.f32 %v607, %v439
    %v609 = vmul.f32 %v607, %v440
    %v610 = vadd.f32 %v592, %v608
    %v611 = vadd.f32 %v593, %v609
    %v612 = vld [vmem:[%s437 + $0x8] sm:$0xff]
    %v613 = vld [vmem:[%s437 + $0x10] sm:$0xff]
    %v614 = vld [vmem:[%s437 + $0x18] sm:$0xff]
    %618 = vrot.lane.b32.xlu0 %v612, 127
    %v619 = vpop.permute.xlu0 %618
    %620 = vrot.lane.b32.xlu0 %v613, 127
    %v621 = vpop.permute.xlu0 %620
    %622 = vrot.lane.b32.xlu0 %v614, 127
    %v623 = vpop.permute.xlu0 %622
    %v624 = vsel %vm289, %v619, %v621
    %v625 = vsel %vm289, %v621, %v623
    %v628 = vsel %vm103, %v624, 0.0
    %v629 = vsel %vm104, %v625, 0.0
    %s630 = sld [smem:[#allocation8 + $0xe]]
    %v631 = vstv %s630
    %v632 = vmul.f32 %v631, %v628
    %v633 = vmul.f32 %v631, %v629
    %v634 = vadd.f32 %v598, %v632
    %v635 = vadd.f32 %v599, %v633
    %s636 = sld [smem:[#allocation8 + $0x29]]
    %v637 = vstv %s636
    %v638 = vmul.f32 %v637, %v628
    %v639 = vmul.f32 %v637, %v629
    %v640 = vadd.f32 %v604, %v638
    %v641 = vadd.f32 %v605, %v639
    %s642 = sld [smem:[#allocation8 + $0x44]]
    %v643 = vstv %s642
    %v644 = vmul.f32 %v643, %v628
    %v645 = vmul.f32 %v643, %v629
    %v646 = vadd.f32 %v610, %v644
    %v647 = vadd.f32 %v611, %v645
    %648 = vrot.lane.b32.xlu0 %v612, 113
    %v649 = vpop.permute.xlu0 %648
    %650 = vrot.lane.b32.xlu0 %v613, 113
    %v651 = vpop.permute.xlu0 %650
    %652 = vrot.lane.b32.xlu0 %v614, 113
    %v653 = vpop.permute.xlu0 %652
    %v654 = vsel %vm320, %v649, %v651
    %v655 = vsel %vm320, %v651, %v653
    %v658 = vsel %vm101, %v654, 0.0
    %v659 = vsel %vm102, %v655, 0.0
    %s660 = sld [smem:[#allocation8 + $0xf]]
    %v661 = vstv %s660
    %v662 = vmul.f32 %v661, %v658
    %v663 = vmul.f32 %v661, %v659
    %v664 = vadd.f32 %v634, %v662
    %v665 = vadd.f32 %v635, %v663
    %s666 = sld [smem:[#allocation8 + $0x2a]]
    %v667 = vstv %s666
    %v668 = vmul.f32 %v667, %v658
    %v669 = vmul.f32 %v667, %v659
    %v670 = vadd.f32 %v640, %v668
    %v671 = vadd.f32 %v641, %v669
    %s672 = sld [smem:[#allocation8 + $0x45]]
    %v673 = vstv %s672
    %v674 = vmul.f32 %v673, %v658
    %v675 = vmul.f32 %v673, %v659
    %v676 = vadd.f32 %v646, %v674
    %v677 = vadd.f32 %v647, %v675
    %s678 = sld [smem:[#allocation8 + $0x10]]
    %v679 = vstv %s678
    %v680 = vmul.f32 %v679, %v612
    %v681 = vmul.f32 %v679, %v613
    %v682 = vmul.f32 %v679, %v614
    %686 = vrot.lane.b32.xlu0 %v680, 112
    %v687 = vpop.permute.xlu0 %686
    %688 = vrot.lane.b32.xlu0 %v681, 112
    %v689 = vpop.permute.xlu0 %688
    %690 = vrot.lane.b32.xlu0 %v682, 112
    %v691 = vpop.permute.xlu0 %690
    %v692 = vsel %vm359, %v687, %v689
    %v693 = vsel %vm359, %v689, %v691
    %v696 = vadd.f32 %v664, %v692
    %v697 = vadd.f32 %v665, %v693
    %s698 = sld [smem:[#allocation8 + $0x2b]]
    %v699 = vstv %s698
    %v700 = vmul.f32 %v699, %v612
    %v701 = vmul.f32 %v699, %v613
    %v702 = vmul.f32 %v699, %v614
    %706 = vrot.lane.b32.xlu0 %v700, 112
    %v707 = vpop.permute.xlu0 %706
    %708 = vrot.lane.b32.xlu0 %v701, 112
    %v709 = vpop.permute.xlu0 %708
    %710 = vrot.lane.b32.xlu0 %v702, 112
    %v711 = vpop.permute.xlu0 %710
    %v712 = vsel %vm359, %v707, %v709
    %v713 = vsel %vm359, %v709, %v711
    %v716 = vadd.f32 %v670, %v712
    %v717 = vadd.f32 %v671, %v713
    %s718 = sld [smem:[#allocation8 + $0x46]]
    %v719 = vstv %s718
    %v720 = vmul.f32 %v719, %v612
    %v721 = vmul.f32 %v719, %v613
    %v722 = vmul.f32 %v719, %v614
    %726 = vrot.lane.b32.xlu0 %v720, 112
    %v727 = vpop.permute.xlu0 %726
    %728 = vrot.lane.b32.xlu0 %v721, 112
    %v729 = vpop.permute.xlu0 %728
    %730 = vrot.lane.b32.xlu0 %v722, 112
    %v731 = vpop.permute.xlu0 %730
    %v732 = vsel %vm359, %v727, %v729
    %v733 = vsel %vm359, %v729, %v731
    %v736 = vadd.f32 %v676, %v732
    %v737 = vadd.f32 %v677, %v733
    %738 = vrot.lane.b32.xlu0 %v612, 111
    %v739 = vpop.permute.xlu0 %738
    %740 = vrot.lane.b32.xlu0 %v613, 111
    %v741 = vpop.permute.xlu0 %740
    %742 = vrot.lane.b32.xlu0 %v614, 111
    %v743 = vpop.permute.xlu0 %742
    %v744 = vsel %vm412, %v739, %v741
    %v745 = vsel %vm412, %v741, %v743
    %v748 = vsel %vm103, %v744, 0.0
    %v749 = vsel %vm104, %v745, 0.0
    %s750 = sld [smem:[#allocation8 + $0x11]]
    %v751 = vstv %s750
    %v752 = vmul.f32 %v751, %v748
    %v753 = vmul.f32 %v751, %v749
    %v754 = vadd.f32 %v696, %v752
    %v755 = vadd.f32 %v697, %v753
    %s756 = sld [smem:[#allocation8 + $0x2c]]
    %v757 = vstv %s756
    %v758 = vmul.f32 %v757, %v748
    %v759 = vmul.f32 %v757, %v749
    %v760 = vadd.f32 %v716, %v758
    %v761 = vadd.f32 %v717, %v759
    %s762 = sld [smem:[#allocation8 + $0x47]]
    %v763 = vstv %s762
    %v764 = vmul.f32 %v763, %v748
    %v765 = vmul.f32 %v763, %v749
    %v766 = vadd.f32 %v736, %v764
    %v767 = vadd.f32 %v737, %v765
    %s768 = scalar_lea.vmem [#allocation2], 64
    %v769 = vld [vmem:[%s768] sm:$0xff]
    %v770 = vld [vmem:[%s768 + $0x8] sm:$0xff]
    %v771 = vld [vmem:[%s768 + $0x10] sm:$0xff]
    %775 = vrot.lane.b32.xlu0 %v769, 17
    %v776 = vpop.permute.xlu0 %775
    %777 = vrot.lane.b32.xlu0 %v770, 17
    %v778 = vpop.permute.xlu0 %777
    %779 = vrot.lane.b32.xlu0 %v771, 17
    %v780 = vpop.permute.xlu0 %779
    %v781 = vsel %vm117, %v776, %v778
    %v782 = vsel %vm117, %v778, %v780
    %v785 = vsel %vm101, %v781, 0.0
    %v786 = vsel %vm102, %v782, 0.0
    %s787 = sld [smem:[#allocation8 + $0x12]]
    %v788 = vstv %s787
    %v789 = vmul.f32 %v788, %v785
    %v790 = vmul.f32 %v788, %v786
    %v791 = vadd.f32 %v754, %v789
    %v792 = vadd.f32 %v755, %v790
    %s793 = sld [smem:[#allocation8 + $0x2d]]
    %v794 = vstv %s793
    %v795 = vmul.f32 %v794, %v785
    %v796 = vmul.f32 %v794, %v786
    %v797 = vadd.f32 %v760, %v795
    %v798 = vadd.f32 %v761, %v796
    %s799 = sld [smem:[#allocation8 + $0x48]]
    %v800 = vstv %s799
    %v801 = vmul.f32 %v800, %v785
    %v802 = vmul.f32 %v800, %v786
    %v803 = vadd.f32 %v766, %v801
    %v804 = vadd.f32 %v767, %v802
    %s805 = sld [smem:[#allocation8 + $0x13]]
    %v806 = vstv %s805
    %v807 = vmul.f32 %v806, %v769
    %v808 = vmul.f32 %v806, %v770
    %v809 = vmul.f32 %v806, %v771
    %813 = vrot.lane.b32.xlu0 %v807, 16
    %v814 = vpop.permute.xlu0 %813
    %815 = vrot.lane.b32.xlu0 %v808, 16
    %v816 = vpop.permute.xlu0 %815
    %817 = vrot.lane.b32.xlu0 %v809, 16
    %v818 = vpop.permute.xlu0 %817
    %v819 = vsel %vm150, %v814, %v816
    %v820 = vsel %vm150, %v816, %v818
    %v823 = vadd.f32 %v791, %v819
    %v824 = vadd.f32 %v792, %v820
    %s825 = sld [smem:[#allocation8 + $0x2e]]
    %v826 = vstv %s825
    %v827 = vmul.f32 %v826, %v769
    %v828 = vmul.f32 %v826, %v770
    %v829 = vmul.f32 %v826, %v771
    %833 = vrot.lane.b32.xlu0 %v827, 16
    %v834 = vpop.permute.xlu0 %833
    %835 = vrot.lane.b32.xlu0 %v828, 16
    %v836 = vpop.permute.xlu0 %835
    %837 = vrot.lane.b32.xlu0 %v829, 16
    %v838 = vpop.permute.xlu0 %837
    %v839 = vsel %vm150, %v834, %v836
    %v840 = vsel %vm150, %v836, %v838
    %v843 = vadd.f32 %v797, %v839
    %v844 = vadd.f32 %v798, %v840
    %s845 = sld [smem:[#allocation8 + $0x49]]
    %v846 = vstv %s845
    %v847 = vmul.f32 %v846, %v769
    %v848 = vmul.f32 %v846, %v770
    %v849 = vmul.f32 %v846, %v771
    %853 = vrot.lane.b32.xlu0 %v847, 16
    %v854 = vpop.permute.xlu0 %853
    %855 = vrot.lane.b32.xlu0 %v848, 16
    %v856 = vpop.permute.xlu0 %855
    %857 = vrot.lane.b32.xlu0 %v849, 16
    %v858 = vpop.permute.xlu0 %857
    %v859 = vsel %vm150, %v854, %v856
    %v860 = vsel %vm150, %v856, %v858
    %v863 = vadd.f32 %v803, %v859
    %v864 = vadd.f32 %v804, %v860
    %865 = vrot.lane.b32.xlu0 %v769, 15
    %v866 = vpop.permute.xlu0 %865
    %867 = vrot.lane.b32.xlu0 %v770, 15
    %v868 = vpop.permute.xlu0 %867
    %869 = vrot.lane.b32.xlu0 %v771, 15
    %v870 = vpop.permute.xlu0 %869
    %v871 = vsel %vm203, %v866, %v868
    %v872 = vsel %vm203, %v868, %v870
    %v875 = vsel %vm103, %v871, 0.0
    %v876 = vsel %vm104, %v872, 0.0
    %s877 = sld [smem:[#allocation8 + $0x14]]
    %v878 = vstv %s877
    %v879 = vmul.f32 %v878, %v875
    %v880 = vmul.f32 %v878, %v876
    %v881 = vadd.f32 %v823, %v879
    %v882 = vadd.f32 %v824, %v880
    %s883 = sld [smem:[#allocation8 + $0x2f]]
    %v884 = vstv %s883
    %v885 = vmul.f32 %v884, %v875
    %v886 = vmul.f32 %v884, %v876
    %v887 = vadd.f32 %v843, %v885
    %v888 = vadd.f32 %v844, %v886
    %s889 = sld [smem:[#allocation8 + $0x4a]]
    %v890 = vstv %s889
    %v891 = vmul.f32 %v890, %v875
    %v892 = vmul.f32 %v890, %v876
    %v893 = vadd.f32 %v863, %v891
    %v894 = vadd.f32 %v864, %v892
    %895 = vrot.lane.b32.xlu0 %v769, 1
    %v896 = vpop.permute.xlu0 %895
    %897 = vrot.lane.b32.xlu0 %v770, 1
    %v898 = vpop.permute.xlu0 %897
    %899 = vrot.lane.b32.xlu0 %v771, 1
    %v900 = vpop.permute.xlu0 %899
    %v901 = vsel %vm234, %v896, %v898
    %v902 = vsel %vm234, %v898, %v900
    %v905 = vsel %vm101, %v901, 0.0
    %v906 = vsel %vm102, %v902, 0.0
    %s907 = sld [smem:[#allocation8 + $0x15]]
    %v908 = vstv %s907
    %v909 = vmul.f32 %v908, %v905
    %v910 = vmul.f32 %v908, %v906
    %v911 = vadd.f32 %v881, %v909
    %v912 = vadd.f32 %v882, %v910
    %s913 = sld [smem:[#allocation8 + $0x30]]
    %v914 = vstv %s913
    %v915 = vmul.f32 %v914, %v905
    %v916 = vmul.f32 %v914, %v906
    %v917 = vadd.f32 %v887, %v915
    %v918 = vadd.f32 %v888, %v916
    %s919 = sld [smem:[#allocation8 + $0x4b]]
    %v920 = vstv %s919
    %v921 = vmul.f32 %v920, %v905
    %v922 = vmul.f32 %v920, %v906
    %v923 = vadd.f32 %v893, %v921
    %v924 = vadd.f32 %v894, %v922
    %s925 = sld [smem:[#allocation8 + $0x16]]
    %v926 = vstv %s925
    %v927 = vmul.f32 %v926, %v770
    %v928 = vmul.f32 %v926, %v771
    %v929 = vadd.f32 %v911, %v927
    %v930 = vadd.f32 %v912, %v928
    %s931 = sld [smem:[#allocation8 + $0x31]]
    %v932 = vstv %s931
    %v933 = vmul.f32 %v932, %v770
    %v934 = vmul.f32 %v932, %v771
    %v935 = vadd.f32 %v917, %v933
    %v936 = vadd.f32 %v918, %v934
    %s937 = sld [smem:[#allocation8 + $0x4c]]
    %v938 = vstv %s937
    %v939 = vmul.f32 %v938, %v770
    %v940 = vmul.f32 %v938, %v771
    %v941 = vadd.f32 %v923, %v939
    %v942 = vadd.f32 %v924, %v940
    %v943 = vld [vmem:[%s768 + $0x8] sm:$0xff]
    %v944 = vld [vmem:[%s768 + $0x10] sm:$0xff]
    %v945 = vld [vmem:[%s768 + $0x18] sm:$0xff]
    %949 = vrot.lane.b32.xlu0 %v943, 127
    %v950 = vpop.permute.xlu0 %949
    %951 = vrot.lane.b32.xlu0 %v944, 127
    %v952 = vpop.permute.xlu0 %951
    %953 = vrot.lane.b32.xlu0 %v945, 127
    %v954 = vpop.permute.xlu0 %953
    %v955 = vsel %vm289, %v950, %v952
    %v956 = vsel %vm289, %v952, %v954
    %v959 = vsel %vm103, %v955, 0.0
    %v960 = vsel %vm104, %v956, 0.0
    %s961 = sld [smem:[#allocation8 + $0x17]]
    %v962 = vstv %s961
    %v963 = vmul.f32 %v962, %v959
    %v964 = vmul.f32 %v962, %v960
    %v965 = vadd.f32 %v929, %v963
    %v966 = vadd.f32 %v930, %v964
    %s967 = sld [smem:[#allocation8 + $0x32]]
    %v968 = vstv %s967
    %v969 = vmul.f32 %v968, %v959
    %v970 = vmul.f32 %v968, %v960
    %v971 = vadd.f32 %v935, %v969
    %v972 = vadd.f32 %v936, %v970
    %s973 = sld [smem:[#allocation8 + $0x4d]]
    %v974 = vstv %s973
    %v975 = vmul.f32 %v974, %v959
    %v976 = vmul.f32 %v974, %v960
    %v977 = vadd.f32 %v941, %v975
    %v978 = vadd.f32 %v942, %v976
    %979 = vrot.lane.b32.xlu0 %v943, 113
    %v980 = vpop.permute.xlu0 %979
    %981 = vrot.lane.b32.xlu0 %v944, 113
    %v982 = vpop.permute.xlu0 %981
    %983 = vrot.lane.b32.xlu0 %v945, 113
    %v984 = vpop.permute.xlu0 %983
    %v985 = vsel %vm320, %v980, %v982
    %v986 = vsel %vm320, %v982, %v984
    %v989 = vsel %vm101, %v985, 0.0
    %v990 = vsel %vm102, %v986, 0.0
    %s991 = sld [smem:[#allocation8 + $0x18]]
    %v992 = vstv %s991
    %v993 = vmul.f32 %v992, %v989
    %v994 = vmul.f32 %v992, %v990
    %v995 = vadd.f32 %v965, %v993
    %v996 = vadd.f32 %v966, %v994
    %s997 = sld [smem:[#allocation8 + $0x33]]
    %v998 = vstv %s997
    %v999 = vmul.f32 %v998, %v989
    %v1000 = vmul.f32 %v998, %v990
    %v1001 = vadd.f32 %v971, %v999
    %v1002 = vadd.f32 %v972, %v1000
    %s1003 = sld [smem:[#allocation8 + $0x4e]]
    %v1004 = vstv %s1003
    %v1005 = vmul.f32 %v1004, %v989
    %v1006 = vmul.f32 %v1004, %v990
    %v1007 = vadd.f32 %v977, %v1005
    %v1008 = vadd.f32 %v978, %v1006
    %s1009 = sld [smem:[#allocation8 + $0x19]]
    %v1010 = vstv %s1009
    %v1011 = vmul.f32 %v1010, %v943
    %v1012 = vmul.f32 %v1010, %v944
    %v1013 = vmul.f32 %v1010, %v945
    %1017 = vrot.lane.b32.xlu0 %v1011, 112
    %v1018 = vpop.permute.xlu0 %1017
    %1019 = vrot.lane.b32.xlu0 %v1012, 112
    %v1020 = vpop.permute.xlu0 %1019
    %1021 = vrot.lane.b32.xlu0 %v1013, 112
    %v1022 = vpop.permute.xlu0 %1021
    %v1023 = vsel %vm359, %v1018, %v1020
    %v1024 = vsel %vm359, %v1020, %v1022
    %v1027 = vadd.f32 %v995, %v1023
    %v1028 = vadd.f32 %v996, %v1024
    %s1029 = sld [smem:[#allocation8 + $0x34]]
    %v1030 = vstv %s1029
    %v1031 = vmul.f32 %v1030, %v943
    %v1032 = vmul.f32 %v1030, %v944
    %v1033 = vmul.f32 %v1030, %v945
    %1037 = vrot.lane.b32.xlu0 %v1031, 112
    %v1038 = vpop.permute.xlu0 %1037
    %1039 = vrot.lane.b32.xlu0 %v1032, 112
    %v1040 = vpop.permute.xlu0 %1039
    %1041 = vrot.lane.b32.xlu0 %v1033, 112
    %v1042 = vpop.permute.xlu0 %1041
    %v1043 = vsel %vm359, %v1038, %v1040
    %v1044 = vsel %vm359, %v1040, %v1042
    %v1047 = vadd.f32 %v1001, %v1043
    %v1048 = vadd.f32 %v1002, %v1044
    %s1049 = sld [smem:[#allocation8 + $0x4f]]
    %v1050 = vstv %s1049
    %v1051 = vmul.f32 %v1050, %v943
    %v1052 = vmul.f32 %v1050, %v944
    %v1053 = vmul.f32 %v1050, %v945
    %1057 = vrot.lane.b32.xlu0 %v1051, 112
    %v1058 = vpop.permute.xlu0 %1057
    %1059 = vrot.lane.b32.xlu0 %v1052, 112
    %v1060 = vpop.permute.xlu0 %1059
    %1061 = vrot.lane.b32.xlu0 %v1053, 112
    %v1062 = vpop.permute.xlu0 %1061
    %v1063 = vsel %vm359, %v1058, %v1060
    %v1064 = vsel %vm359, %v1060, %v1062
    %v1067 = vadd.f32 %v1007, %v1063
    %v1068 = vadd.f32 %v1008, %v1064
    %1069 = vrot.lane.b32.xlu0 %v943, 111
    %v1070 = vpop.permute.xlu0 %1069
    %1071 = vrot.lane.b32.xlu0 %v944, 111
    %v1072 = vpop.permute.xlu0 %1071
    %1073 = vrot.lane.b32.xlu0 %v945, 111
    %v1074 = vpop.permute.xlu0 %1073
    %v1075 = vsel %vm412, %v1070, %v1072
    %v1076 = vsel %vm412, %v1072, %v1074
    %v1079 = vsel %vm103, %v1075, 0.0
    %v1080 = vsel %vm104, %v1076, 0.0
    %s1081 = sld [smem:[#allocation8 + $0x1a]]
    %v1082 = vstv %s1081
    %v1083 = vmul.f32 %v1082, %v1079
    %v1084 = vmul.f32 %v1082, %v1080
    %v1085 = vadd.f32 %v1027, %v1083
    %v1086 = vadd.f32 %v1028, %v1084
    %s1087 = sld [smem:[#allocation8 + $0x35]]
    %v1088 = vstv %s1087
    %v1089 = vmul.f32 %v1088, %v1079
    %v1090 = vmul.f32 %v1088, %v1080
    %v1091 = vadd.f32 %v1047, %v1089
    %v1092 = vadd.f32 %v1048, %v1090
    %s1093 = sld [smem:[#allocation8 + $0x50]]
    %v1094 = vstv %s1093
    %v1095 = vmul.f32 %v1094, %v1079
    %v1096 = vmul.f32 %v1094, %v1080
    %v1097 = vadd.f32 %v1067, %v1095
    %v1098 = vadd.f32 %v1068, %v1096
    %v1099 = vld [vmem:[#allocation3] sm:$0xff]
    %v1100 = vld [vmem:[#allocation3 + $0x8] sm:$0xff]
    %s1101 = sld [smem:[#allocation9]]
    %v1102 = vstv %s1101
    %v1103 = vadd.f32 %v1085, %v1102
    %v1104 = vadd.f32 %v1086, %v1102
    %v1105 = vmax.f32 %v1103, 0.0
    %v1106 = vmax.f32 %v1104, 0.0
    %v1107 = vadd.f32 %v1105, %v1099
    %v1108 = vadd.f32 %v1106, %v1100
    %1109 = vst [vmem:[#allocation10] sm:$0xff] %v1107
    %1110 = vst [vmem:[#allocation10 + $0x8] sm:$0xff] %v1108
    %s1111 = scalar_lea.vmem [#allocation3], 16
    %v1112 = vld [vmem:[%s1111] sm:$0xff]
    %v1113 = vld [vmem:[%s1111 + $0x8] sm:$0xff]
    %s1114 = sld [smem:[#allocation9 + $0x1]]
    %v1115 = vstv %s1114
    %v1116 = vadd.f32 %v1091, %v1115
    %v1117 = vadd.f32 %v1092, %v1115
    %v1118 = vmax.f32 %v1116, 0.0
    %v1119 = vmax.f32 %v1117, 0.0
    %v1120 = vadd.f32 %v1118, %v1112
    %v1121 = vadd.f32 %v1119, %v1113
    %s1122 = scalar_lea.vmem [#allocation10], 16
    %1123 = vst [vmem:[%s1122] sm:$0xff] %v1120
    %1124 = vst [vmem:[%s1122 + $0x8] sm:$0xff] %v1121
    %s1125 = scalar_lea.vmem [#allocation3], 32
    %v1126 = vld [vmem:[%s1125] sm:$0xff]
    %v1127 = vld [vmem:[%s1125 + $0x8] sm:$0xff]
    %s1128 = sld [smem:[#allocation9 + $0x2]]
    %v1129 = vstv %s1128
    %v1130 = vadd.f32 %v1097, %v1129
    %v1131 = vadd.f32 %v1098, %v1129
    %v1132 = vmax.f32 %v1130, 0.0
    %v1133 = vmax.f32 %v1131, 0.0
    %v1134 = vadd.f32 %v1132, %v1126
    %v1135 = vadd.f32 %v1133, %v1127
    %s1136 = scalar_lea.vmem [#allocation10], 32
    %1137 = vst [vmem:[%s1136] sm:$0xff] %v1134
    %1138 = vst [vmem:[%s1136 + $0x8] sm:$0xff] %v1135
    // Predicated region
    $region26: #{tpu_custom_call.1} parent=1 // pred_check
      _
    $region27: #{tpu_custom_call.1} parent=1 // pred_check_branch
      %1140 = sbr.rel (0) target = $region29
    $region28: #{tpu_custom_call.1} parent=1 // pred_region
      %1142 = vsyncadd [#allocation5], 0
      %s1143 = sshll.u32 [#allocation10], 4
      %s1144 = int_to_ptr.vmem [resolvable:$true] %s1143
      %s1145 = sshll.u32 %s3, 4
      %s1146 = int_to_ptr.hbm [resolvable:$true] %s1145
      %1151 = dma.vmem_to_hbm [thread:$0]  %s1144, 768, %s1146, [#allocation5], 256, 256, 16
    $region29: #{tpu_custom_call.1} parent=1 // pred_fallthru
      _
    // Predicated region
    $region30: #{tpu_custom_call.1} parent=1 // pred_check
      _
    $region31: #{tpu_custom_call.1} parent=1 // pred_check_branch
      %1153 = sbr.rel (0) target = $region33
    $region32: #{tpu_custom_call.1} parent=1 // pred_region
      %1155 = dma.done [#allocation5], 768
    $region33: #{tpu_custom_call.1} parent=1 // pred_fallthru
      _
    %1156 = vsyncpa [#allocation4], 1
    %1157 = vsyncpa [#allocation5], 1
    %1158 = vsyncpa [#allocation6], 1
    %1159 = vsyncpa [#allocation7], 1

</llo_original>
